<compile_context>
chip_gen: v5e
topology: v5e:2x2
jax: 0.10.0
libtpu: 0.0.40
codegen_flags: <defaults>
</compile_context>

<pallas_src>
import jax
import jax.numpy as jnp
from jax import lax
from jax.experimental import pallas as pl
from jax.experimental.pallas import tpu as pltpu


# ---------------------------------------------------------------------------
# Pallas kernel: shared MLP (1x1 conv = per-point matmul) + folded BN + ReLU,
# followed by max-pool over the nsample axis of each group.
# ---------------------------------------------------------------------------
def _make_mlp_max_kernel(num_layers, s, tpm, cin):
    def kernel(*refs):
        x_ref = refs[0]
        out_ref = refs[-1]
        params = refs[1:-1]  # (w, b) per layer

        # (1, S, TPM, Cin) -> (S*TPM, Cin); rows are sample-major (s*TPM + p).
        h = x_ref[...].reshape(s * tpm, cin)  # bf16

        # Hidden layers: channels-last, bf16 matmul, f32 accumulate + bias/ReLU.
        for l in range(num_layers - 1):
            w = params[2 * l][...]        # (Cin_l, Cout_l) bf16, BN scale folded
            b = params[2 * l + 1][...]    # (1, Cout_l) f32, BN bias folded
            a = jnp.dot(h, w, preferred_element_type=jnp.float32)
            h = jnp.maximum(a + b, 0.0).astype(jnp.bfloat16)

        # Last layer computed channels-first so the result is lane-dense:
        #   (C_last, Cprev) . (S*TPM, Cprev)^T  ->  (C_last, S*TPM)
        w_t = params[2 * (num_layers - 1)][...]      # (C_last, Cprev) bf16
        b_t = params[2 * (num_layers - 1) + 1][...]  # (C_last, 1) f32
        a = lax.dot_general(w_t, h, (((1,), (1,)), ((), ())),
                            preferred_element_type=jnp.float32)
        a = jnp.maximum(a + b_t, 0.0)                # (C_last, S*TPM) f32

        # Max-pool over samples: S-1 aligned (C_last, TPM) VPU maximums
        # (columns s*TPM .. s*TPM+TPM-1 hold sample s of every query point).
        pooled = a[:, 0:tpm]
        for si in range(1, s):
            pooled = jnp.maximum(pooled, a[:, si * tpm:(si + 1) * tpm])

        out_ref[0] = pooled.astype(out_ref.dtype)    # lane-dense (C_last, TPM)
    return kernel


def _pick_point_tile(npoint):
    """Largest query-point tile <= 128 that divides npoint (falls back to npoint)."""
    for t in (128, 64, 32, 16):
        if npoint % t == 0:
            return t
    return npoint


def mlp_and_maxpool(grouped, folded_params, *, tpm):
    """grouped: (B, S, npoint, Cin) bf16 (relative xyz ++ features, sample-major).
    folded_params: list of (w (Cin_l, Cout_l) f32 with BN scale folded,
                            bias (Cout_l,) f32 with BN folded).
    Returns (B, Cout_last, npoint) f32."""
    B, S, npoint, Cin = grouped.shape
    assert npoint % tpm == 0
    L = len(folded_params)
    c_last = folded_params[-1][0].shape[1]

    in_specs = [pl.BlockSpec((1, S, tpm, Cin), lambda b, p: (b, 0, p, 0))]
    args = [grouped]
    for l, (w, bias) in enumerate(folded_params):
        ci, co = w.shape
        if l < L - 1:
            in_specs += [pl.BlockSpec((ci, co), lambda b, p: (0, 0)),
                         pl.BlockSpec((1, co), lambda b, p: (0, 0))]
            args += [w.astype(jnp.bfloat16),
                     bias.reshape(1, co).astype(jnp.float32)]
        else:
            # Last layer is consumed transposed (channels-first) by the kernel.
            in_specs += [pl.BlockSpec((co, ci), lambda b, p: (0, 0)),
                         pl.BlockSpec((co, 1), lambda b, p: (0, 0))]
            args += [w.T.astype(jnp.bfloat16),
                     bias.reshape(co, 1).astype(jnp.float32)]

    out = pl.pallas_call(
        _make_mlp_max_kernel(L, S, tpm, Cin),
        out_shape=jax.ShapeDtypeStruct((B, c_last, npoint), jnp.float32),
        grid=(B, npoint // tpm),
        in_specs=in_specs,
        out_specs=pl.BlockSpec((1, c_last, tpm), lambda b, p: (b, 0, p)),
        compiler_params=pltpu.CompilerParams(
            dimension_semantics=("parallel", "parallel"),
            vmem_limit_bytes=32 * 1024 * 1024),  # ~2 MiB/step used; safe on v7x
    )(*args)
    return out


# ---------------------------------------------------------------------------
# Plain-JAX glue: furthest point sampling, ball query, grouping.
# (These are the sequential / data-dependent index-selection CUDA ops of
# pointnet2; kept outside the Pallas hot path.)
# ---------------------------------------------------------------------------
def furthest_point_sample(xyz, npoint):
    """xyz: (B, N, 3) -> (B, npoint) int32 indices (starts at index 0, like CUDA op)."""
    B, N, _ = xyz.shape

    def body(i, state):
        idxs, dists, farthest = state
        idxs = idxs.at[:, i].set(farthest)
        centroid = jnp.take_along_axis(xyz, farthest[:, None, None], axis=1)  # (B,1,3)
        d = jnp.sum((xyz - centroid) ** 2, axis=-1)                           # (B,N)
        dists = jnp.minimum(dists, d)
        farthest = jnp.argmax(dists, axis=-1).astype(jnp.int32)
        return idxs, dists, farthest

    idxs = jnp.zeros((B, npoint), jnp.int32)
    dists = jnp.full((B, N), 1e10, jnp.float32)
    farthest = jnp.zeros((B,), jnp.int32)
    idxs, _, _ = lax.fori_loop(0, npoint, body, (idxs, dists, farthest))
    return idxs


def ball_query(radius, nsample, xyz, new_xyz):
    """(B, npoint, nsample) int32 indices of the first `nsample` points within
    `radius` of each query point; short groups padded with the first index."""
    N = xyz.shape[1]
    d2 = jnp.sum((new_xyz[:, :, None, :] - xyz[:, None, :, :]) ** 2, axis=-1)  # (B,np,N)
    within = d2 < radius * radius
    key = jnp.where(within, jnp.arange(N, dtype=jnp.int32), N)
    sorted_key = jnp.sort(key, axis=-1)[..., :nsample]          # (B, npoint, nsample)
    first = sorted_key[..., :1]
    idx = jnp.where(sorted_key == N, first, sorted_key)
    idx = jnp.where(idx == N, 0, idx)                            # never hit: query pt is in xyz
    return idx.astype(jnp.int32)


def pointnet_sa_forward(xyz, features, npoint, grouper_cfgs, mlps_params):
    """Equivalent of _PointnetSAModuleBase.forward (use_xyz=True groupers).
    xyz: (B, N, 3), features: (B, N, C)
      -> (new_xyz (B, npoint, 3), new_features (B, sum_k mlps[k][-1], npoint))."""
    B, N, _ = xyz.shape
    fps_idx = furthest_point_sample(xyz, npoint)                 # (B, npoint)
    b1 = jnp.arange(B)[:, None]
    new_xyz = xyz[b1, fps_idx]                                   # (B, npoint, 3)
    tpm = _pick_point_tile(npoint)

    outs = []
    for (radius, nsample), folded in zip(grouper_cfgs, mlps_params):
        idx = ball_query(radius, nsample, xyz, new_xyz)          # (B, npoint, S)
        idx_t = jnp.transpose(idx, (0, 2, 1))                    # (B, S, npoint) (tiny)
        b2 = jnp.arange(B)[:, None, None]
        g_xyz = xyz[b2, idx_t] - new_xyz[:, None, :, :]          # (B, S, npoint, 3)
        g_feat = features[b2, idx_t]                             # (B, S, npoint, C)
        grouped = jnp.concatenate([g_xyz, g_feat], -1).astype(jnp.bfloat16)
        # TODO(synk): move this neighborhood gather into the Pallas kernel
        # (scalar-prefetched indices + in-VMEM dynamic gather / DMA gather) to
        # remove the nsample-x HBM inflation of the grouped tensor.
        outs.append(mlp_and_maxpool(grouped, folded, tpm=tpm))   # (B, c_k, npoint)
    return new_xyz, jnp.concatenate(outs, axis=1)                # (B, sum c_k, npoint)


# ---------------------------------------------------------------------------
# Pure-JAX reference (same bf16 matmul casts) for correctness checking.
# ---------------------------------------------------------------------------
def reference_forward(xyz, features, npoint, grouper_cfgs, mlps_params):
    B, N, _ = xyz.shape
    fps_idx = furthest_point_sample(xyz, npoint)
    b1 = jnp.arange(B)[:, None]
    new_xyz = xyz[b1, fps_idx]
    outs = []
    for (radius, nsample), folded in zip(grouper_cfgs, mlps_params):
        idx = ball_query(radius, nsample, xyz, new_xyz)          # (B, npoint, S)
        b2 = jnp.arange(B)[:, None, None]
        g = jnp.concatenate([xyz[b2, idx] - new_xyz[:, :, None, :],
                             features[b2, idx]], axis=-1)        # (B, npoint, S, Cin)
        h = g.astype(jnp.bfloat16)
        for l, (w, bias) in enumerate(folded):
            a = jnp.einsum('bpsc,cd->bpsd', h, w.astype(jnp.bfloat16),
                           preferred_element_type=jnp.float32)
            a = jnp.maximum(a + bias.astype(jnp.float32), 0.0)
            h = a if l == len(folded) - 1 else a.astype(jnp.bfloat16)
        pooled = jnp.max(h, axis=2)                              # (B, npoint, c_last)
        outs.append(jnp.transpose(pooled, (0, 2, 1)))            # (B, c_last, npoint)
    return new_xyz, jnp.concatenate(outs, axis=1)


# ---------------------------------------------------------------------------
# Deterministic synthetic parameters: Conv2d 1x1 weights with eval-mode
# BatchNorm folded in (scale folded into the weights, bias kept separate).
# ---------------------------------------------------------------------------
def init_mlp_params(key, channels):
    params = []
    for i in range(len(channels) - 1):
        ci, co = channels[i], channels[i + 1]
        key, k1, k2, k3, k4, k5 = jax.random.split(key, 6)
        w = 0.1 * jax.random.normal(k1, (ci, co), jnp.float32)
        gamma = 1.0 + 0.05 * jax.random.normal(k2, (co,), jnp.float32)
        beta = 0.05 * jax.random.normal(k3, (co,), jnp.float32)
        mean = 0.05 * jax.random.normal(k4, (co,), jnp.float32)
        var = 1.0 + 0.1 * jnp.abs(jax.random.normal(k5, (co,), jnp.float32))
        scale = gamma / jnp.sqrt(var + 1e-5)
        bias = beta - mean * scale
        params.append((w * scale[None, :], bias))   # BN scale folded into weights
    return params


if __name__ == "__main__":
    B, N, C = 2, 512, 4
    npoint = 256
    # two groupers (MSG-style): (radius, nsample)
    grouper_cfgs = [(0.2, 8), (0.4, 16)]
    # shared MLP channel specs; input channels = 3 (rel. xyz) + C (use_xyz=True)
    mlp_specs = [[3 + C, 16, 32], [3 + C, 32, 64]]

    key = jax.random.PRNGKey(0)
    kx, kf, kp0, kp1 = jax.random.split(key, 4)
    xyz = jax.random.uniform(kx, (B, N, 3), jnp.float32)
    features = jax.random.normal(kf, (B, N, C), jnp.float32)
    mlps_params = [init_mlp_params(kp0, mlp_specs[0]),
                   init_mlp_params(kp1, mlp_specs[1])]

    new_xyz, new_features = pointnet_sa_forward(
        xyz, features, npoint, grouper_cfgs, mlps_params)
    new_xyz = jax.block_until_ready(new_xyz)
    new_features = jax.block_until_ready(new_features)

    assert new_xyz.shape == (B, npoint, 3)
    assert new_features.shape == (B, sum(s[-1] for s in mlp_specs), npoint)
    assert bool(jnp.all(jnp.isfinite(new_features)))

    ref_xyz, ref_features = reference_forward(
        xyz, features, npoint, grouper_cfgs, mlps_params)
    err = float(jnp.max(jnp.abs(new_features - ref_features)))
    assert err < 2e-2, f"max abs err vs reference: {err}"

    print("KERNEL_OK")
</pallas_src>

<mosaic_0001>
module attributes {stable_mosaic.version = 11 : i64} {
  func.func @kernel(%arg0: i32, %arg1: i32, %arg2: memref<1x8x128x7xbf16, #tpu.memory_space<vmem>>, %arg3: memref<7x16xbf16, #tpu.memory_space<vmem>>, %arg4: memref<1x16xf32, #tpu.memory_space<vmem>>, %arg5: memref<32x16xbf16, #tpu.memory_space<vmem>>, %arg6: memref<32x1xf32, #tpu.memory_space<vmem>>, %arg7: memref<1x32x128xf32, #tpu.memory_space<vmem>>) attributes {dimension_semantics = [#tpu.dimension_semantics<parallel>, #tpu.dimension_semantics<parallel>], iteration_bounds = array<i64: 2, 2>, scalar_prefetch = 0 : i64, scratch_operands = 0 : i64, tpu.core_type = #tpu.core_type<tc>, window_params = [{transform_indices = @transform_0, window_bounds = array<i64: 1, 8, 128, 7>}, {pipeline_mode = #tpu.pipeline_mode<synchronous>, transform_indices = @transform_1, window_bounds = array<i64: 7, 16>}, {pipeline_mode = #tpu.pipeline_mode<synchronous>, transform_indices = @transform_2, window_bounds = array<i64: 1, 16>}, {pipeline_mode = #tpu.pipeline_mode<synchronous>, transform_indices = @transform_3, window_bounds = array<i64: 32, 16>}, {pipeline_mode = #tpu.pipeline_mode<synchronous>, transform_indices = @transform_4, window_bounds = array<i64: 32, 1>}, {transform_indices = @transform_5, window_bounds = array<i64: 1, 32, 128>}]} {
    %c0 = arith.constant 0 : index
    %c0_0 = arith.constant 0 : index
    %c0_1 = arith.constant 0 : index
    %c0_2 = arith.constant 0 : index
    %0 = vector.load %arg2[%c0, %c0_0, %c0_1, %c0_2] : memref<1x8x128x7xbf16, #tpu.memory_space<vmem>>, vector<1x8x128x7xbf16>
    %1 = vector.shape_cast %0 : vector<1x8x128x7xbf16> to vector<1024x7xbf16>
    %c0_3 = arith.constant 0 : index
    %c0_4 = arith.constant 0 : index
    %2 = vector.load %arg3[%c0_3, %c0_4] : memref<7x16xbf16, #tpu.memory_space<vmem>>, vector<7x16xbf16>
    %c0_5 = arith.constant 0 : index
    %c0_6 = arith.constant 0 : index
    %3 = vector.load %arg4[%c0_5, %c0_6] : memref<1x16xf32, #tpu.memory_space<vmem>>, vector<1x16xf32>
    %cst = arith.constant dense<0.000000e+00> : vector<1024x16xf32>
    %4 = tpu.matmul %1, %2, %cst {dimension_numbers = #tpu.dot_dimension_numbers<[1], [0], [0], [1], [0, 0, 1, 1], [], []>} : vector<1024x7xbf16>, vector<7x16xbf16>, vector<1024x16xf32> -> vector<1024x16xf32>
    %5 = vector.broadcast %3 : vector<1x16xf32> to vector<1024x16xf32>
    %6 = arith.addf %4, %5 : vector<1024x16xf32>
    %cst_7 = arith.constant 0.000000e+00 : f32
    %7 = vector.broadcast %cst_7 : f32 to vector<1024x16xf32>
    %8 = arith.maximumf %6, %7 : vector<1024x16xf32>
    %9 = arith.truncf %8 : vector<1024x16xf32> to vector<1024x16xbf16>
    %c0_8 = arith.constant 0 : index
    %c0_9 = arith.constant 0 : index
    %10 = vector.load %arg5[%c0_8, %c0_9] : memref<32x16xbf16, #tpu.memory_space<vmem>>, vector<32x16xbf16>
    %c0_10 = arith.constant 0 : index
    %c0_11 = arith.constant 0 : index
    %11 = vector.load %arg6[%c0_10, %c0_11] : memref<32x1xf32, #tpu.memory_space<vmem>>, vector<32x1xf32>
    %cst_12 = arith.constant dense<0.000000e+00> : vector<32x1024xf32>
    %12 = tpu.matmul %10, %9, %cst_12 {dimension_numbers = #tpu.dot_dimension_numbers<[1], [1], [0], [0], [0, 0, 1, 0], [], []>} : vector<32x16xbf16>, vector<1024x16xbf16>, vector<32x1024xf32> -> vector<32x1024xf32>
    %13 = vector.broadcast %11 : vector<32x1xf32> to vector<32x1024xf32>
    %14 = arith.addf %12, %13 : vector<32x1024xf32>
    %cst_13 = arith.constant 0.000000e+00 : f32
    %15 = vector.broadcast %cst_13 : f32 to vector<32x1024xf32>
    %16 = arith.maximumf %14, %15 : vector<32x1024xf32>
    %17 = vector.extract_strided_slice %16 {offsets = [0, 0], sizes = [32, 128], strides = [1, 1]} : vector<32x1024xf32> to vector<32x128xf32>
    %18 = vector.extract_strided_slice %16 {offsets = [0, 128], sizes = [32, 128], strides = [1, 1]} : vector<32x1024xf32> to vector<32x128xf32>
    %19 = arith.maximumf %17, %18 : vector<32x128xf32>
    %20 = vector.extract_strided_slice %16 {offsets = [0, 256], sizes = [32, 128], strides = [1, 1]} : vector<32x1024xf32> to vector<32x128xf32>
    %21 = arith.maximumf %19, %20 : vector<32x128xf32>
    %22 = vector.extract_strided_slice %16 {offsets = [0, 384], sizes = [32, 128], strides = [1, 1]} : vector<32x1024xf32> to vector<32x128xf32>
    %23 = arith.maximumf %21, %22 : vector<32x128xf32>
    %24 = vector.extract_strided_slice %16 {offsets = [0, 512], sizes = [32, 128], strides = [1, 1]} : vector<32x1024xf32> to vector<32x128xf32>
    %25 = arith.maximumf %23, %24 : vector<32x128xf32>
    %26 = vector.extract_strided_slice %16 {offsets = [0, 640], sizes = [32, 128], strides = [1, 1]} : vector<32x1024xf32> to vector<32x128xf32>
    %27 = arith.maximumf %25, %26 : vector<32x128xf32>
    %28 = vector.extract_strided_slice %16 {offsets = [0, 768], sizes = [32, 128], strides = [1, 1]} : vector<32x1024xf32> to vector<32x128xf32>
    %29 = arith.maximumf %27, %28 : vector<32x128xf32>
    %30 = vector.extract_strided_slice %16 {offsets = [0, 896], sizes = [32, 128], strides = [1, 1]} : vector<32x1024xf32> to vector<32x128xf32>
    %31 = arith.maximumf %29, %30 : vector<32x128xf32>
    %c0_14 = arith.constant 0 : index
    %c0_15 = arith.constant 0 : index
    %c0_16 = arith.constant 0 : index
    %32 = vector.load %arg7[%c0_14, %c0_15, %c0_16] : memref<1x32x128xf32, #tpu.memory_space<vmem>>, vector<1x32x128xf32>
    %33 = vector.shape_cast %32 : vector<1x32x128xf32> to vector<32x128xf32>
    %34 = vector.shape_cast %31 : vector<32x128xf32> to vector<1x32x128xf32>
    tpu.vector_store %arg7[%c0_14, %c0_15, %c0_16], %34 {strides = array<i32>} : memref<1x32x128xf32, #tpu.memory_space<vmem>>, vector<1x32x128xf32>,
    return
  }
  func.func @transform_0(%arg0: i32, %arg1: i32) -> (i32, i32, i32, i32) {
    %c0_i32 = arith.constant 0 : i32
    %c0_i32_0 = arith.constant 0 : i32
    %c0_i32_1 = arith.constant 0 : i32
    return %arg0, %c0_i32, %arg1, %c0_i32_0 : i32, i32, i32, i32
  }
  func.func @transform_1(%arg0: i32, %arg1: i32) -> (i32, i32) {
    %c0_i32 = arith.constant 0 : i32
    %c0_i32_0 = arith.constant 0 : i32
    %c0_i32_1 = arith.constant 0 : i32
    return %c0_i32, %c0_i32_0 : i32, i32
  }
  func.func @transform_2(%arg0: i32, %arg1: i32) -> (i32, i32) {
    %c0_i32 = arith.constant 0 : i32
    %c0_i32_0 = arith.constant 0 : i32
    %c0_i32_1 = arith.constant 0 : i32
    return %c0_i32, %c0_i32_0 : i32, i32
  }
  func.func @transform_3(%arg0: i32, %arg1: i32) -> (i32, i32) {
    %c0_i32 = arith.constant 0 : i32
    %c0_i32_0 = arith.constant 0 : i32
    %c0_i32_1 = arith.constant 0 : i32
    return %c0_i32, %c0_i32_0 : i32, i32
  }
  func.func @transform_4(%arg0: i32, %arg1: i32) -> (i32, i32) {
    %c0_i32 = arith.constant 0 : i32
    %c0_i32_0 = arith.constant 0 : i32
    %c0_i32_1 = arith.constant 0 : i32
    return %c0_i32, %c0_i32_0 : i32, i32
  }
  func.func @transform_5(%arg0: i32, %arg1: i32) -> (i32, i32, i32) {
    %c0_i32 = arith.constant 0 : i32
    %c0_i32_0 = arith.constant 0 : i32
    return %arg0, %c0_i32, %arg1 : i32, i32, i32
  }
}

</mosaic_0001>

<llo_original>
// kernel: tpu_custom_call.1
$region0: #{tpu_custom_call.1}
  #allocation0 [shape = 'u32[]', space=smem, size = 0x4, offset = 0x4, fixed_abs, tag = 'smem constant byte address 0x4 - core index']
  #allocation1 [shape = 'u32[72,128]{1,0:T(1,128)}', space=vmem, size = 0x9000, scoped, tag = 'internal scratch']
  %s0 = inlined_call_operand.vmem [shape: bf16[2,8,256,7], index: 0, kind: input, shape index: {}]
  %s1 = inlined_call_operand.vmem [shape: bf16[7,16], index: 1, kind: input, shape index: {}]
  %s2 = inlined_call_operand.vmem [shape: f32[1,16], index: 2, kind: input, shape index: {}]
  %s3 = inlined_call_operand.vmem [shape: bf16[32,16], index: 3, kind: input, shape index: {}]
  %s4 = inlined_call_operand.vmem [shape: f32[32,1], index: 4, kind: input, shape index: {}]
  %s5 = inlined_call_operand.hbm [shape: f32[2,32,256], index: 5, kind: output, shape index: {}]
  %s6 = sld [smem:[#allocation0]]
  $region94: #{tpu_custom_call.1} parent=0
    _
  %s8 = ssub.s32 1, %s6
  %s9 = scalar_select 0, %s8, %s6
  $region1: #{tpu_custom_call.1} parent=0
    #allocation2 [shape = 'u8[524288]{0}', space=vmem, size = 0x80000, scoped, tag = 'input window, operand 0']
    #allocation3 [shape = 'u8[32768]{0}', space=vmem, size = 0x8000, scoped, tag = 'output window, operand 0']
    #allocation4 [shape = 's32[2]{0}', space=sflag, size = 0x8, scoped, tag = 'scoped memory for tpu_custom_call.1']
    %10 = vsyncpa [#allocation4], 0
    %s11 = scalar_lea.sflag [#allocation4], 1
    %12 = vsyncpa %s11, 0
    loop: start=0, step=1, limit=6
    $region2: #{tpu_custom_call.1} parent=1 // loop_pre_header
      _
    $region3: #{tpu_custom_call.1} parent=1 // loop_header
      %s14 = sphi 0, %s18
      %p15 = scmp.ge.s32.totalorder %s14, 6
      %s21 = sphi 0, %s33
      %s22 = sphi 0, %s29
      %s23 = sphi 0, %s21
      %s24 = sphi 0, %s22
      %s25 = sphi 0, %s23
      %s26 = sphi 0, %s24
      %s38 = sphi 0, %s40
      %s41 = sphi 0, %s38
      %s42 = sphi 0, %s41
      %s58 = sphi 0, %s42
      %s62 = sphi 0, %s62
      %s64 = sphi 0, %s62
      %s65 = sphi 0, %s64
      %s79 = sphi 0, %s65
      %s83 = sphi 0, %s83
      %s85 = sphi 0, %s83
      %s86 = sphi 0, %s85
      %s100 = sphi 0, %s86
      %s104 = sphi 0, %s104
      %s106 = sphi 0, %s104
      %s107 = sphi 0, %s106
      %s121 = sphi 0, %s107
      %s125 = sphi 0, %s125
      %s127 = sphi 0, %s125
      %s128 = sphi 0, %s127
      %s142 = sphi 0, %s128
      %s150 = sphi 0, %s152
      %s153 = sphi 0, %s150
      %s154 = sphi 0, %s153
      %s170 = sphi 0, %s154
    $region4: #{tpu_custom_call.1} parent=1 // loop_header_branch
      %17 = sbr.rel (%p15) target = $region8
    $region5: #{tpu_custom_call.1} parent=1 // loop_body
      %s19 = ssub.s32 %s14, 1
      %s20 = ssub.s32 %s14, 2
      %s27 = sadd.s32 1, %s22
      %p28 = scmp.ge.s32.totalorder %s27, 2
      %s29 = scalar_select %p28, 0, %s27
      %s30 = sadd.s32 1, %s21
      %s31 = scalar_select %p28, %s30, %s21
      %p32 = scmp.ge.s32.totalorder %s31, 2
      %s33 = scalar_select %p32, 0, %s31
      %s34 = ssub.s32 %s21, %s33
      %s35 = ssub.s32 %s22, %s29
      %s36 = sor.u32 %s34, %s35
      %p37 = scmp.eq.s32.totalorder %s36, 0
      %s39 = sadd.s32 %s38, 1
      %s40 = scalar_select %p37, %s38, %s39
      %p43 = pneg %p37
      %p44 = scmp.eq.s32.totalorder %s14, 3
      %p45 = por %p43, %p44
      %p46 = scmp.ne.s32.totalorder %s38, %s41
      %p47 = scmp.eq.s32.totalorder %s14, 0
      %p48 = por %p46, %p47
      %p49 = scmp.ne.s32.totalorder %s38, %s41
      %p50 = scmp.eq.s32.totalorder %s19, 3
      %p51 = por %p49, %p50
      %p52 = scmp.ne.s32.totalorder %s41, %s42
      %p53 = scmp.eq.s32.totalorder %s19, 0
      %p54 = por %p52, %p53
      %p55 = scmp.ne.s32.totalorder %s41, %s42
      %p56 = scmp.eq.s32.totalorder %s20, 3
      %p57 = por %p55, %p56
      %p59 = scmp.ne.s32.totalorder %s42, %s58
      %p60 = scmp.eq.s32.totalorder %s20, 0
      %p61 = por %p59, %p60
      %s63 = sadd.s32 %s62, 1
      %p66 = scmp.eq.s32.totalorder %s14, 3
      %p67 = scmp.ne.s32.totalorder %s62, %s64
      %p68 = scmp.eq.s32.totalorder %s14, 0
      %p69 = por %p67, %p68
      %p70 = scmp.ne.s32.totalorder %s62, %s64
      %p71 = scmp.eq.s32.totalorder %s19, 3
      %p72 = por %p70, %p71
      %p73 = scmp.ne.s32.totalorder %s64, %s65
      %p74 = scmp.eq.s32.totalorder %s19, 0
      %p75 = por %p73, %p74
      %p76 = scmp.ne.s32.totalorder %s64, %s65
      %p77 = scmp.eq.s32.totalorder %s20, 3
      %p78 = por %p76, %p77
      %p80 = scmp.ne.s32.totalorder %s65, %s79
      %p81 = scmp.eq.s32.totalorder %s20, 0
      %p82 = por %p80, %p81
      %s84 = sadd.s32 %s83, 1
      %p87 = scmp.eq.s32.totalorder %s14, 3
      %p88 = scmp.ne.s32.totalorder %s83, %s85
      %p89 = scmp.eq.s32.totalorder %s14, 0
      %p90 = por %p88, %p89
      %p91 = scmp.ne.s32.totalorder %s83, %s85
      %p92 = scmp.eq.s32.totalorder %s19, 3
      %p93 = por %p91, %p92
      %p94 = scmp.ne.s32.totalorder %s85, %s86
      %p95 = scmp.eq.s32.totalorder %s19, 0
      %p96 = por %p94, %p95
      %p97 = scmp.ne.s32.totalorder %s85, %s86
      %p98 = scmp.eq.s32.totalorder %s20, 3
      %p99 = por %p97, %p98
      %p101 = scmp.ne.s32.totalorder %s86, %s100
      %p102 = scmp.eq.s32.totalorder %s20, 0
      %p103 = por %p101, %p102
      %s105 = sadd.s32 %s104, 1
      %p108 = scmp.eq.s32.totalorder %s14, 3
      %p109 = scmp.ne.s32.totalorder %s104, %s106
      %p110 = scmp.eq.s32.totalorder %s14, 0
      %p111 = por %p109, %p110
      %p112 = scmp.ne.s32.totalorder %s104, %s106
      %p113 = scmp.eq.s32.totalorder %s19, 3
      %p114 = por %p112, %p113
      %p115 = scmp.ne.s32.totalorder %s106, %s107
      %p116 = scmp.eq.s32.totalorder %s19, 0
      %p117 = por %p115, %p116
      %p118 = scmp.ne.s32.totalorder %s106, %s107
      %p119 = scmp.eq.s32.totalorder %s20, 3
      %p120 = por %p118, %p119
      %p122 = scmp.ne.s32.totalorder %s107, %s121
      %p123 = scmp.eq.s32.totalorder %s20, 0
      %p124 = por %p122, %p123
      %s126 = sadd.s32 %s125, 1
      %p129 = scmp.eq.s32.totalorder %s14, 3
      %p130 = scmp.ne.s32.totalorder %s125, %s127
      %p131 = scmp.eq.s32.totalorder %s14, 0
      %p132 = por %p130, %p131
      %p133 = scmp.ne.s32.totalorder %s125, %s127
      %p134 = scmp.eq.s32.totalorder %s19, 3
      %p135 = por %p133, %p134
      %p136 = scmp.ne.s32.totalorder %s127, %s128
      %p137 = scmp.eq.s32.totalorder %s19, 0
      %p138 = por %p136, %p137
      %p139 = scmp.ne.s32.totalorder %s127, %s128
      %p140 = scmp.eq.s32.totalorder %s20, 3
      %p141 = por %p139, %p140
      %p143 = scmp.ne.s32.totalorder %s128, %s142
      %p144 = scmp.eq.s32.totalorder %s20, 0
      %p145 = por %p143, %p144
      %s146 = ssub.s32 %s21, %s33
      %s147 = ssub.s32 %s22, %s29
      %s148 = sor.u32 %s146, %s147
      %p149 = scmp.eq.s32.totalorder %s148, 0
      %s151 = sadd.s32 %s150, 1
      %s152 = scalar_select %p149, %s150, %s151
      %p155 = pneg %p149
      %p156 = scmp.eq.s32.totalorder %s14, 3
      %p157 = por %p155, %p156
      %p158 = scmp.ne.s32.totalorder %s150, %s153
      %p159 = scmp.eq.s32.totalorder %s14, 0
      %p160 = por %p158, %p159
      %p161 = scmp.ne.s32.totalorder %s150, %s153
      %p162 = scmp.eq.s32.totalorder %s19, 3
      %p163 = por %p161, %p162
      %p164 = scmp.ne.s32.totalorder %s153, %s154
      %p165 = scmp.eq.s32.totalorder %s19, 0
      %p166 = por %p164, %p165
      %p167 = scmp.ne.s32.totalorder %s153, %s154
      %p168 = scmp.eq.s32.totalorder %s20, 3
      %p169 = por %p167, %p168
      %p171 = scmp.ne.s32.totalorder %s154, %s170
      %p172 = scmp.eq.s32.totalorder %s20, 0
      %p173 = por %p171, %p172
      %p174 = scmp.le.s32.totalorder 1, %s14
      %p175 = scmp.lt.s32.totalorder %s14, 5
      %p176 = pnand %p174, %p175
      %p177 = pneg %p176
      // Predicated region
      $region9: #{tpu_custom_call.1} parent=5 // pred_check
        _
      $region10: #{tpu_custom_call.1} parent=5 // pred_check_branch
        %179 = sbr.rel (%p176) target = $region12
      $region11: #{tpu_custom_call.1} parent=5 // pred_region
        %s180 = ssub.s32 %s14, 1
        // Predicated region
        $region13: #{tpu_custom_call.1} parent=11 // pred_check
          %p181 = pneg %p75
        $region14: #{tpu_custom_call.1} parent=11 // pred_check_branch
          %183 = sbr.rel (%p181) target = $region16
        $region15: #{tpu_custom_call.1} parent=11 // pred_region
          _
        $region16: #{tpu_custom_call.1} parent=11 // pred_fallthru
          _
        // Predicated region
        $region17: #{tpu_custom_call.1} parent=11 // pred_check
          %p184 = pneg %p96
        $region18: #{tpu_custom_call.1} parent=11 // pred_check_branch
          %186 = sbr.rel (%p184) target = $region20
        $region19: #{tpu_custom_call.1} parent=11 // pred_region
          _
        $region20: #{tpu_custom_call.1} parent=11 // pred_fallthru
          _
        // Predicated region
        $region21: #{tpu_custom_call.1} parent=11 // pred_check
          %p187 = pneg %p117
        $region22: #{tpu_custom_call.1} parent=11 // pred_check_branch
          %189 = sbr.rel (%p187) target = $region24
        $region23: #{tpu_custom_call.1} parent=11 // pred_region
          _
        $region24: #{tpu_custom_call.1} parent=11 // pred_fallthru
          _
        // Predicated region
        $region25: #{tpu_custom_call.1} parent=11 // pred_check
          %p190 = pneg %p138
        $region26: #{tpu_custom_call.1} parent=11 // pred_check_branch
          %192 = sbr.rel (%p190) target = $region28
        $region27: #{tpu_custom_call.1} parent=11 // pred_region
          _
        $region28: #{tpu_custom_call.1} parent=11 // pred_fallthru
          _
      $region12: #{tpu_custom_call.1} parent=5 // pred_fallthru
        _
      %p193 = scmp.lt.s32.totalorder %s14, 4
      // Predicated region
      $region29: #{tpu_custom_call.1} parent=5 // pred_check
        %p194 = pneg %p193
      $region30: #{tpu_custom_call.1} parent=5 // pred_check_branch
        %196 = sbr.rel (%p194) target = $region32
      $region31: #{tpu_custom_call.1} parent=5 // pred_region
        // Predicated region
        $region33: #{tpu_custom_call.1} parent=31 // pred_check
          %p197 = pneg %p48
        $region34: #{tpu_custom_call.1} parent=31 // pred_check_branch
          %199 = sbr.rel (%p197) target = $region36
        $region35: #{tpu_custom_call.1} parent=31 // pred_region
          %s200 = sand.u32 %s38, 1
          %s201 = sand.u32 %s38, 1
          %s202 = smul.addr %s201, 512
          %s203 = scalar_lea.vmem [#allocation2], %s202
          %s204 = smul.u32 16, %s22
          %s205 = smul.addr %s21, 256
          %s206 = sadd.s32 %s204, %s205
          %s207 = smul.addr %s206, 4
          %s208 = scalar_lea.vmem %s0, %s207
          // Predicated region
          $region37: #{tpu_custom_call.1} parent=35 // pred_check
            _
          $region38: #{tpu_custom_call.1} parent=35 // pred_check_branch
            %210 = sbr.rel (0) target = $region40
          $region39: #{tpu_custom_call.1} parent=35 // pred_region
            // Predicated region
            $region41: #{tpu_custom_call.1} parent=39 // pred_check
              _
            $region42: #{tpu_custom_call.1} parent=39 // pred_check_branch
              %212 = sbr.rel target = $region44
            $region43: #{tpu_custom_call.1} parent=39 // pred_region
              // Predicated region
              $region56: #{tpu_custom_call.1} parent=43 // pred_check
                _
              $region57: #{tpu_custom_call.1} parent=43 // pred_check_branch
                %482 = sbr.rel (0) target = $region59
              $region58: #{tpu_custom_call.1} parent=43 // pred_region
                loop: start=0, step=1, limit=1
                $region60: #{tpu_custom_call.1} parent=58 // loop_pre_header
                  _
                $region61: #{tpu_custom_call.1} parent=58 // loop_header
                  %s484 = sphi 0, %s488
                  %p485 = scmp.ge.s32.totalorder %s484, 1
                  %s489 = sphi %s208, %s208
                  %s490 = sphi %s203, %s203
                $region62: #{tpu_custom_call.1} parent=58 // loop_header_branch
                  %487 = sbr.rel (%p485) target = $region66
                $region63: #{tpu_custom_call.1} parent=58 // loop_body
                  _
                $region64: #{tpu_custom_call.1} parent=58 // loop_footer
                  %s488 = sadd.s32 1, %s484
                $region65: #{tpu_custom_call.1} parent=58 // loop_footer_branch
                  %483 = sbr.rel target = $region61
                $region66: #{tpu_custom_call.1} parent=58 // loop_exit
                  _
                %s492 = ssub.s32 16, 1
                loop: start=0, step=1, limit=1
                $region67: #{tpu_custom_call.1} parent=58 // loop_pre_header
                  _
                $region68: #{tpu_custom_call.1} parent=58 // loop_header
                  %s494 = sphi 0, %s498
                  %p495 = scmp.ge.s32.totalorder %s494, 1
                  %s499 = sphi %s208, %s208
                  %s500 = sphi %s203, %s203
                $region69: #{tpu_custom_call.1} parent=58 // loop_header_branch
                  %497 = sbr.rel (%p495) target = $region73
                $region70: #{tpu_custom_call.1} parent=58 // loop_body
                  %v501 = vld [vmem:[%s499] sm:%s492]
                  %502 = vst [vmem:[%s500] sm:%s492] %v501
                  %v503 = vld [vmem:[%s499 + $0x4] sm:%s492]
                  %504 = vst [vmem:[%s500 + $0x4] sm:%s492] %v503
                  %v505 = vld [vmem:[%s499 + $0x8] sm:%s492]
                  %506 = vst [vmem:[%s500 + $0x8] sm:%s492] %v505
                  %v507 = vld [vmem:[%s499 + $0xc] sm:%s492]
                  %508 = vst [vmem:[%s500 + $0xc] sm:%s492] %v507
                  %v509 = vld [vmem:[%s499 + $0x10] sm:%s492]
                  %510 = vst [vmem:[%s500 + $0x10] sm:%s492] %v509
                  %v511 = vld [vmem:[%s499 + $0x14] sm:%s492]
                  %512 = vst [vmem:[%s500 + $0x14] sm:%s492] %v511
                  %v513 = vld [vmem:[%s499 + $0x18] sm:%s492]
                  %514 = vst [vmem:[%s500 + $0x18] sm:%s492] %v513
                  %v515 = vld [vmem:[%s499 + $0x1c] sm:%s492]
                  %516 = vst [vmem:[%s500 + $0x1c] sm:%s492] %v515
                  %v517 = vld [vmem:[%s499 + $0x20] sm:%s492]
                  %518 = vst [vmem:[%s500 + $0x20] sm:%s492] %v517
                  %v519 = vld [vmem:[%s499 + $0x24] sm:%s492]
                  %520 = vst [vmem:[%s500 + $0x24] sm:%s492] %v519
                  %v521 = vld [vmem:[%s499 + $0x28] sm:%s492]
                  %522 = vst [vmem:[%s500 + $0x28] sm:%s492] %v521
                  %v523 = vld [vmem:[%s499 + $0x2c] sm:%s492]
                  %524 = vst [vmem:[%s500 + $0x2c] sm:%s492] %v523
                  %v525 = vld [vmem:[%s499 + $0x30] sm:%s492]
                  %526 = vst [vmem:[%s500 + $0x30] sm:%s492] %v525
                  %v527 = vld [vmem:[%s499 + $0x34] sm:%s492]
                  %528 = vst [vmem:[%s500 + $0x34] sm:%s492] %v527
                  %v529 = vld [vmem:[%s499 + $0x38] sm:%s492]
                  %530 = vst [vmem:[%s500 + $0x38] sm:%s492] %v529
                  %v531 = vld [vmem:[%s499 + $0x3c] sm:%s492]
                  %532 = vst [vmem:[%s500 + $0x3c] sm:%s492] %v531
                  %v533 = vld [vmem:[%s499 + $0x80] sm:%s492]
                  %534 = vst [vmem:[%s500 + $0x40] sm:%s492] %v533
                  %v535 = vld [vmem:[%s499 + $0x84] sm:%s492]
                  %536 = vst [vmem:[%s500 + $0x44] sm:%s492] %v535
                  %v537 = vld [vmem:[%s499 + $0x88] sm:%s492]
                  %538 = vst [vmem:[%s500 + $0x48] sm:%s492] %v537
                  %v539 = vld [vmem:[%s499 + $0x8c] sm:%s492]
                  %540 = vst [vmem:[%s500 + $0x4c] sm:%s492] %v539
                  %v541 = vld [vmem:[%s499 + $0x90] sm:%s492]
                  %542 = vst [vmem:[%s500 + $0x50] sm:%s492] %v541
                  %v543 = vld [vmem:[%s499 + $0x94] sm:%s492]
                  %544 = vst [vmem:[%s500 + $0x54] sm:%s492] %v543
                  %v545 = vld [vmem:[%s499 + $0x98] sm:%s492]
                  %546 = vst [vmem:[%s500 + $0x58] sm:%s492] %v545
                  %v547 = vld [vmem:[%s499 + $0x9c] sm:%s492]
                  %548 = vst [vmem:[%s500 + $0x5c] sm:%s492] %v547
                  %v549 = vld [vmem:[%s499 + $0xa0] sm:%s492]
                  %550 = vst [vmem:[%s500 + $0x60] sm:%s492] %v549
                  %v551 = vld [vmem:[%s499 + $0xa4] sm:%s492]
                  %552 = vst [vmem:[%s500 + $0x64] sm:%s492] %v551
                  %v553 = vld [vmem:[%s499 + $0xa8] sm:%s492]
                  %554 = vst [vmem:[%s500 + $0x68] sm:%s492] %v553
                  %v555 = vld [vmem:[%s499 + $0xac] sm:%s492]
                  %556 = vst [vmem:[%s500 + $0x6c] sm:%s492] %v555
                  %v557 = vld [vmem:[%s499 + $0xb0] sm:%s492]
                  %558 = vst [vmem:[%s500 + $0x70] sm:%s492] %v557
                  %v559 = vld [vmem:[%s499 + $0xb4] sm:%s492]
                  %560 = vst [vmem:[%s500 + $0x74] sm:%s492] %v559
                  %v561 = vld [vmem:[%s499 + $0xb8] sm:%s492]
                  %562 = vst [vmem:[%s500 + $0x78] sm:%s492] %v561
                  %v563 = vld [vmem:[%s499 + $0xbc] sm:%s492]
                  %564 = vst [vmem:[%s500 + $0x7c] sm:%s492] %v563
                  %v565 = vld [vmem:[%s499 + $0x100] sm:%s492]
                  %566 = vst [vmem:[%s500 + $0x80] sm:%s492] %v565
                  %v567 = vld [vmem:[%s499 + $0x104] sm:%s492]
                  %568 = vst [vmem:[%s500 + $0x84] sm:%s492] %v567
                  %v569 = vld [vmem:[%s499 + $0x108] sm:%s492]
                  %570 = vst [vmem:[%s500 + $0x88] sm:%s492] %v569
                  %v571 = vld [vmem:[%s499 + $0x10c] sm:%s492]
                  %572 = vst [vmem:[%s500 + $0x8c] sm:%s492] %v571
                  %v573 = vld [vmem:[%s499 + $0x110] sm:%s492]
                  %574 = vst [vmem:[%s500 + $0x90] sm:%s492] %v573
                  %v575 = vld [vmem:[%s499 + $0x114] sm:%s492]
                  %576 = vst [vmem:[%s500 + $0x94] sm:%s492] %v575
                  %v577 = vld [vmem:[%s499 + $0x118] sm:%s492]
                  %578 = vst [vmem:[%s500 + $0x98] sm:%s492] %v577
                  %v579 = vld [vmem:[%s499 + $0x11c] sm:%s492]
                  %580 = vst [vmem:[%s500 + $0x9c] sm:%s492] %v579
                  %v581 = vld [vmem:[%s499 + $0x120] sm:%s492]
                  %582 = vst [vmem:[%s500 + $0xa0] sm:%s492] %v581
                  %v583 = vld [vmem:[%s499 + $0x124] sm:%s492]
                  %584 = vst [vmem:[%s500 + $0xa4] sm:%s492] %v583
                  %v585 = vld [vmem:[%s499 + $0x128] sm:%s492]
                  %586 = vst [vmem:[%s500 + $0xa8] sm:%s492] %v585
                  %v587 = vld [vmem:[%s499 + $0x12c] sm:%s492]
                  %588 = vst [vmem:[%s500 + $0xac] sm:%s492] %v587
                  %v589 = vld [vmem:[%s499 + $0x130] sm:%s492]
                  %590 = vst [vmem:[%s500 + $0xb0] sm:%s492] %v589
                  %v591 = vld [vmem:[%s499 + $0x134] sm:%s492]
                  %592 = vst [vmem:[%s500 + $0xb4] sm:%s492] %v591
                  %v593 = vld [vmem:[%s499 + $0x138] sm:%s492]
                  %594 = vst [vmem:[%s500 + $0xb8] sm:%s492] %v593
                  %v595 = vld [vmem:[%s499 + $0x13c] sm:%s492]
                  %596 = vst [vmem:[%s500 + $0xbc] sm:%s492] %v595
                  %v597 = vld [vmem:[%s499 + $0x180] sm:%s492]
                  %598 = vst [vmem:[%s500 + $0xc0] sm:%s492] %v597
                  %v599 = vld [vmem:[%s499 + $0x184] sm:%s492]
                  %600 = vst [vmem:[%s500 + $0xc4] sm:%s492] %v599
                  %v601 = vld [vmem:[%s499 + $0x188] sm:%s492]
                  %602 = vst [vmem:[%s500 + $0xc8] sm:%s492] %v601
                  %v603 = vld [vmem:[%s499 + $0x18c] sm:%s492]
                  %604 = vst [vmem:[%s500 + $0xcc] sm:%s492] %v603
                  %v605 = vld [vmem:[%s499 + $0x190] sm:%s492]
                  %606 = vst [vmem:[%s500 + $0xd0] sm:%s492] %v605
                  %v607 = vld [vmem:[%s499 + $0x194] sm:%s492]
                  %608 = vst [vmem:[%s500 + $0xd4] sm:%s492] %v607
                  %v609 = vld [vmem:[%s499 + $0x198] sm:%s492]
                  %610 = vst [vmem:[%s500 + $0xd8] sm:%s492] %v609
                  %v611 = vld [vmem:[%s499 + $0x19c] sm:%s492]
                  %612 = vst [vmem:[%s500 + $0xdc] sm:%s492] %v611
                  %v613 = vld [vmem:[%s499 + $0x1a0] sm:%s492]
                  %614 = vst [vmem:[%s500 + $0xe0] sm:%s492] %v613
                  %v615 = vld [vmem:[%s499 + $0x1a4] sm:%s492]
                  %616 = vst [vmem:[%s500 + $0xe4] sm:%s492] %v615
                  %v617 = vld [vmem:[%s499 + $0x1a8] sm:%s492]
                  %618 = vst [vmem:[%s500 + $0xe8] sm:%s492] %v617
                  %v619 = vld [vmem:[%s499 + $0x1ac] sm:%s492]
                  %620 = vst [vmem:[%s500 + $0xec] sm:%s492] %v619
                  %v621 = vld [vmem:[%s499 + $0x1b0] sm:%s492]
                  %622 = vst [vmem:[%s500 + $0xf0] sm:%s492] %v621
                  %v623 = vld [vmem:[%s499 + $0x1b4] sm:%s492]
                  %624 = vst [vmem:[%s500 + $0xf4] sm:%s492] %v623
                  %v625 = vld [vmem:[%s499 + $0x1b8] sm:%s492]
                  %626 = vst [vmem:[%s500 + $0xf8] sm:%s492] %v625
                  %v627 = vld [vmem:[%s499 + $0x1bc] sm:%s492]
                  %628 = vst [vmem:[%s500 + $0xfc] sm:%s492] %v627
                  %v629 = vld [vmem:[%s499 + $0x200] sm:%s492]
                  %630 = vst [vmem:[%s500 + $0x100] sm:%s492] %v629
                  %v631 = vld [vmem:[%s499 + $0x204] sm:%s492]
                  %632 = vst [vmem:[%s500 + $0x104] sm:%s492] %v631
                  %v633 = vld [vmem:[%s499 + $0x208] sm:%s492]
                  %634 = vst [vmem:[%s500 + $0x108] sm:%s492] %v633
                  %v635 = vld [vmem:[%s499 + $0x20c] sm:%s492]
                  %636 = vst [vmem:[%s500 + $0x10c] sm:%s492] %v635
                  %v637 = vld [vmem:[%s499 + $0x210] sm:%s492]
                  %638 = vst [vmem:[%s500 + $0x110] sm:%s492] %v637
                  %v639 = vld [vmem:[%s499 + $0x214] sm:%s492]
                  %640 = vst [vmem:[%s500 + $0x114] sm:%s492] %v639
                  %v641 = vld [vmem:[%s499 + $0x218] sm:%s492]
                  %642 = vst [vmem:[%s500 + $0x118] sm:%s492] %v641
                  %v643 = vld [vmem:[%s499 + $0x21c] sm:%s492]
                  %644 = vst [vmem:[%s500 + $0x11c] sm:%s492] %v643
                  %v645 = vld [vmem:[%s499 + $0x220] sm:%s492]
                  %646 = vst [vmem:[%s500 + $0x120] sm:%s492] %v645
                  %v647 = vld [vmem:[%s499 + $0x224] sm:%s492]
                  %648 = vst [vmem:[%s500 + $0x124] sm:%s492] %v647
                  %v649 = vld [vmem:[%s499 + $0x228] sm:%s492]
                  %650 = vst [vmem:[%s500 + $0x128] sm:%s492] %v649
                  %v651 = vld [vmem:[%s499 + $0x22c] sm:%s492]
                  %652 = vst [vmem:[%s500 + $0x12c] sm:%s492] %v651
                  %v653 = vld [vmem:[%s499 + $0x230] sm:%s492]
                  %654 = vst [vmem:[%s500 + $0x130] sm:%s492] %v653
                  %v655 = vld [vmem:[%s499 + $0x234] sm:%s492]
                  %656 = vst [vmem:[%s500 + $0x134] sm:%s492] %v655
                  %v657 = vld [vmem:[%s499 + $0x238] sm:%s492]
                  %658 = vst [vmem:[%s500 + $0x138] sm:%s492] %v657
                  %v659 = vld [vmem:[%s499 + $0x23c] sm:%s492]
                  %660 = vst [vmem:[%s500 + $0x13c] sm:%s492] %v659
                  %v661 = vld [vmem:[%s499 + $0x280] sm:%s492]
                  %662 = vst [vmem:[%s500 + $0x140] sm:%s492] %v661
                  %v663 = vld [vmem:[%s499 + $0x284] sm:%s492]
                  %664 = vst [vmem:[%s500 + $0x144] sm:%s492] %v663
                  %v665 = vld [vmem:[%s499 + $0x288] sm:%s492]
                  %666 = vst [vmem:[%s500 + $0x148] sm:%s492] %v665
                  %v667 = vld [vmem:[%s499 + $0x28c] sm:%s492]
                  %668 = vst [vmem:[%s500 + $0x14c] sm:%s492] %v667
                  %v669 = vld [vmem:[%s499 + $0x290] sm:%s492]
                  %670 = vst [vmem:[%s500 + $0x150] sm:%s492] %v669
                  %v671 = vld [vmem:[%s499 + $0x294] sm:%s492]
                  %672 = vst [vmem:[%s500 + $0x154] sm:%s492] %v671
                  %v673 = vld [vmem:[%s499 + $0x298] sm:%s492]
                  %674 = vst [vmem:[%s500 + $0x158] sm:%s492] %v673
                  %v675 = vld [vmem:[%s499 + $0x29c] sm:%s492]
                  %676 = vst [vmem:[%s500 + $0x15c] sm:%s492] %v675
                  %v677 = vld [vmem:[%s499 + $0x2a0] sm:%s492]
                  %678 = vst [vmem:[%s500 + $0x160] sm:%s492] %v677
                  %v679 = vld [vmem:[%s499 + $0x2a4] sm:%s492]
                  %680 = vst [vmem:[%s500 + $0x164] sm:%s492] %v679
                  %v681 = vld [vmem:[%s499 + $0x2a8] sm:%s492]
                  %682 = vst [vmem:[%s500 + $0x168] sm:%s492] %v681
                  %v683 = vld [vmem:[%s499 + $0x2ac] sm:%s492]
                  %684 = vst [vmem:[%s500 + $0x16c] sm:%s492] %v683
                  %v685 = vld [vmem:[%s499 + $0x2b0] sm:%s492]
                  %686 = vst [vmem:[%s500 + $0x170] sm:%s492] %v685
                  %v687 = vld [vmem:[%s499 + $0x2b4] sm:%s492]
                  %688 = vst [vmem:[%s500 + $0x174] sm:%s492] %v687
                  %v689 = vld [vmem:[%s499 + $0x2b8] sm:%s492]
                  %690 = vst [vmem:[%s500 + $0x178] sm:%s492] %v689
                  %v691 = vld [vmem:[%s499 + $0x2bc] sm:%s492]
                  %692 = vst [vmem:[%s500 + $0x17c] sm:%s492] %v691
                  %v693 = vld [vmem:[%s499 + $0x300] sm:%s492]
                  %694 = vst [vmem:[%s500 + $0x180] sm:%s492] %v693
                  %v695 = vld [vmem:[%s499 + $0x304] sm:%s492]
                  %696 = vst [vmem:[%s500 + $0x184] sm:%s492] %v695
                  %v697 = vld [vmem:[%s499 + $0x308] sm:%s492]
                  %698 = vst [vmem:[%s500 + $0x188] sm:%s492] %v697
                  %v699 = vld [vmem:[%s499 + $0x30c] sm:%s492]
                  %700 = vst [vmem:[%s500 + $0x18c] sm:%s492] %v699
                  %v701 = vld [vmem:[%s499 + $0x310] sm:%s492]
                  %702 = vst [vmem:[%s500 + $0x190] sm:%s492] %v701
                  %v703 = vld [vmem:[%s499 + $0x314] sm:%s492]
                  %704 = vst [vmem:[%s500 + $0x194] sm:%s492] %v703
                  %v705 = vld [vmem:[%s499 + $0x318] sm:%s492]
                  %706 = vst [vmem:[%s500 + $0x198] sm:%s492] %v705
                  %v707 = vld [vmem:[%s499 + $0x31c] sm:%s492]
                  %708 = vst [vmem:[%s500 + $0x19c] sm:%s492] %v707
                  %v709 = vld [vmem:[%s499 + $0x320] sm:%s492]
                  %710 = vst [vmem:[%s500 + $0x1a0] sm:%s492] %v709
                  %v711 = vld [vmem:[%s499 + $0x324] sm:%s492]
                  %712 = vst [vmem:[%s500 + $0x1a4] sm:%s492] %v711
                  %v713 = vld [vmem:[%s499 + $0x328] sm:%s492]
                  %714 = vst [vmem:[%s500 + $0x1a8] sm:%s492] %v713
                  %v715 = vld [vmem:[%s499 + $0x32c] sm:%s492]
                  %716 = vst [vmem:[%s500 + $0x1ac] sm:%s492] %v715
                  %v717 = vld [vmem:[%s499 + $0x330] sm:%s492]
                  %718 = vst [vmem:[%s500 + $0x1b0] sm:%s492] %v717
                  %v719 = vld [vmem:[%s499 + $0x334] sm:%s492]
                  %720 = vst [vmem:[%s500 + $0x1b4] sm:%s492] %v719
                  %v721 = vld [vmem:[%s499 + $0x338] sm:%s492]
                  %722 = vst [vmem:[%s500 + $0x1b8] sm:%s492] %v721
                  %v723 = vld [vmem:[%s499 + $0x33c] sm:%s492]
                  %724 = vst [vmem:[%s500 + $0x1bc] sm:%s492] %v723
                  %v725 = vld [vmem:[%s499 + $0x380] sm:%s492]
                  %726 = vst [vmem:[%s500 + $0x1c0] sm:%s492] %v725
                  %v727 = vld [vmem:[%s499 + $0x384] sm:%s492]
                  %728 = vst [vmem:[%s500 + $0x1c4] sm:%s492] %v727
                  %v729 = vld [vmem:[%s499 + $0x388] sm:%s492]
                  %730 = vst [vmem:[%s500 + $0x1c8] sm:%s492] %v729
                  %v731 = vld [vmem:[%s499 + $0x38c] sm:%s492]
                  %732 = vst [vmem:[%s500 + $0x1cc] sm:%s492] %v731
                  %v733 = vld [vmem:[%s499 + $0x390] sm:%s492]
                  %734 = vst [vmem:[%s500 + $0x1d0] sm:%s492] %v733
                  %v735 = vld [vmem:[%s499 + $0x394] sm:%s492]
                  %736 = vst [vmem:[%s500 + $0x1d4] sm:%s492] %v735
                  %v737 = vld [vmem:[%s499 + $0x398] sm:%s492]
                  %738 = vst [vmem:[%s500 + $0x1d8] sm:%s492] %v737
                  %v739 = vld [vmem:[%s499 + $0x39c] sm:%s492]
                  %740 = vst [vmem:[%s500 + $0x1dc] sm:%s492] %v739
                  %v741 = vld [vmem:[%s499 + $0x3a0] sm:%s492]
                  %742 = vst [vmem:[%s500 + $0x1e0] sm:%s492] %v741
                  %v743 = vld [vmem:[%s499 + $0x3a4] sm:%s492]
                  %744 = vst [vmem:[%s500 + $0x1e4] sm:%s492] %v743
                  %v745 = vld [vmem:[%s499 + $0x3a8] sm:%s492]
                  %746 = vst [vmem:[%s500 + $0x1e8] sm:%s492] %v745
                  %v747 = vld [vmem:[%s499 + $0x3ac] sm:%s492]
                  %748 = vst [vmem:[%s500 + $0x1ec] sm:%s492] %v747
                  %v749 = vld [vmem:[%s499 + $0x3b0] sm:%s492]
                  %750 = vst [vmem:[%s500 + $0x1f0] sm:%s492] %v749
                  %v751 = vld [vmem:[%s499 + $0x3b4] sm:%s492]
                  %752 = vst [vmem:[%s500 + $0x1f4] sm:%s492] %v751
                  %v753 = vld [vmem:[%s499 + $0x3b8] sm:%s492]
                  %754 = vst [vmem:[%s500 + $0x1f8] sm:%s492] %v753
                  %v755 = vld [vmem:[%s499 + $0x3bc] sm:%s492]
                  %756 = vst [vmem:[%s500 + $0x1fc] sm:%s492] %v755
                $region71: #{tpu_custom_call.1} parent=58 // loop_footer
                  %s498 = sadd.s32 1, %s494
                $region72: #{tpu_custom_call.1} parent=58 // loop_footer_branch
                  %493 = sbr.rel target = $region68
                $region73: #{tpu_custom_call.1} parent=58 // loop_exit
                  _
              $region59: #{tpu_custom_call.1} parent=43 // pred_fallthru
                _
            $region44: #{tpu_custom_call.1} parent=39 // pred_fallthru
              _
            // Predicated region
            $region45: #{tpu_custom_call.1} parent=39 // pred_check
              _
            $region46: #{tpu_custom_call.1} parent=39 // pred_check_branch
              %214 = sbr.rel (0) target = $region48
            $region47: #{tpu_custom_call.1} parent=39 // pred_region
              %s216 = ssub.s32 16, 1
              loop: start=0, step=1, limit=1
              $region49: #{tpu_custom_call.1} parent=47 // loop_pre_header
                _
              $region50: #{tpu_custom_call.1} parent=47 // loop_header
                %s218 = sphi 0, %s222
                %p219 = scmp.ge.s32.totalorder %s218, 1
                %s223 = sphi %s208, %s208
                %s224 = sphi %s203, %s203
              $region51: #{tpu_custom_call.1} parent=47 // loop_header_branch
                %221 = sbr.rel (%p219) target = $region55
              $region52: #{tpu_custom_call.1} parent=47 // loop_body
                %v225 = vld [vmem:[%s223] sm:%s216]
                %226 = vst [vmem:[%s224] sm:%s216] %v225
                %v227 = vld [vmem:[%s223 + $0x4] sm:%s216]
                %228 = vst [vmem:[%s224 + $0x4] sm:%s216] %v227
                %v229 = vld [vmem:[%s223 + $0x8] sm:%s216]
                %230 = vst [vmem:[%s224 + $0x8] sm:%s216] %v229
                %v231 = vld [vmem:[%s223 + $0xc] sm:%s216]
                %232 = vst [vmem:[%s224 + $0xc] sm:%s216] %v231
                %v233 = vld [vmem:[%s223 + $0x10] sm:%s216]
                %234 = vst [vmem:[%s224 + $0x10] sm:%s216] %v233
                %v235 = vld [vmem:[%s223 + $0x14] sm:%s216]
                %236 = vst [vmem:[%s224 + $0x14] sm:%s216] %v235
                %v237 = vld [vmem:[%s223 + $0x18] sm:%s216]
                %238 = vst [vmem:[%s224 + $0x18] sm:%s216] %v237
                %v239 = vld [vmem:[%s223 + $0x1c] sm:%s216]
                %240 = vst [vmem:[%s224 + $0x1c] sm:%s216] %v239
                %v241 = vld [vmem:[%s223 + $0x20] sm:%s216]
                %242 = vst [vmem:[%s224 + $0x20] sm:%s216] %v241
                %v243 = vld [vmem:[%s223 + $0x24] sm:%s216]
                %244 = vst [vmem:[%s224 + $0x24] sm:%s216] %v243
                %v245 = vld [vmem:[%s223 + $0x28] sm:%s216]
                %246 = vst [vmem:[%s224 + $0x28] sm:%s216] %v245
                %v247 = vld [vmem:[%s223 + $0x2c] sm:%s216]
                %248 = vst [vmem:[%s224 + $0x2c] sm:%s216] %v247
                %v249 = vld [vmem:[%s223 + $0x30] sm:%s216]
                %250 = vst [vmem:[%s224 + $0x30] sm:%s216] %v249
                %v251 = vld [vmem:[%s223 + $0x34] sm:%s216]
                %252 = vst [vmem:[%s224 + $0x34] sm:%s216] %v251
                %v253 = vld [vmem:[%s223 + $0x38] sm:%s216]
                %254 = vst [vmem:[%s224 + $0x38] sm:%s216] %v253
                %v255 = vld [vmem:[%s223 + $0x3c] sm:%s216]
                %256 = vst [vmem:[%s224 + $0x3c] sm:%s216] %v255
                %v257 = vld [vmem:[%s223 + $0x80] sm:%s216]
                %258 = vst [vmem:[%s224 + $0x40] sm:%s216] %v257
                %v259 = vld [vmem:[%s223 + $0x84] sm:%s216]
                %260 = vst [vmem:[%s224 + $0x44] sm:%s216] %v259
                %v261 = vld [vmem:[%s223 + $0x88] sm:%s216]
                %262 = vst [vmem:[%s224 + $0x48] sm:%s216] %v261
                %v263 = vld [vmem:[%s223 + $0x8c] sm:%s216]
                %264 = vst [vmem:[%s224 + $0x4c] sm:%s216] %v263
                %v265 = vld [vmem:[%s223 + $0x90] sm:%s216]
                %266 = vst [vmem:[%s224 + $0x50] sm:%s216] %v265
                %v267 = vld [vmem:[%s223 + $0x94] sm:%s216]
                %268 = vst [vmem:[%s224 + $0x54] sm:%s216] %v267
                %v269 = vld [vmem:[%s223 + $0x98] sm:%s216]
                %270 = vst [vmem:[%s224 + $0x58] sm:%s216] %v269
                %v271 = vld [vmem:[%s223 + $0x9c] sm:%s216]
                %272 = vst [vmem:[%s224 + $0x5c] sm:%s216] %v271
                %v273 = vld [vmem:[%s223 + $0xa0] sm:%s216]
                %274 = vst [vmem:[%s224 + $0x60] sm:%s216] %v273
                %v275 = vld [vmem:[%s223 + $0xa4] sm:%s216]
                %276 = vst [vmem:[%s224 + $0x64] sm:%s216] %v275
                %v277 = vld [vmem:[%s223 + $0xa8] sm:%s216]
                %278 = vst [vmem:[%s224 + $0x68] sm:%s216] %v277
                %v279 = vld [vmem:[%s223 + $0xac] sm:%s216]
                %280 = vst [vmem:[%s224 + $0x6c] sm:%s216] %v279
                %v281 = vld [vmem:[%s223 + $0xb0] sm:%s216]
                %282 = vst [vmem:[%s224 + $0x70] sm:%s216] %v281
                %v283 = vld [vmem:[%s223 + $0xb4] sm:%s216]
                %284 = vst [vmem:[%s224 + $0x74] sm:%s216] %v283
                %v285 = vld [vmem:[%s223 + $0xb8] sm:%s216]
                %286 = vst [vmem:[%s224 + $0x78] sm:%s216] %v285
                %v287 = vld [vmem:[%s223 + $0xbc] sm:%s216]
                %288 = vst [vmem:[%s224 + $0x7c] sm:%s216] %v287
                %v289 = vld [vmem:[%s223 + $0x100] sm:%s216]
                %290 = vst [vmem:[%s224 + $0x80] sm:%s216] %v289
                %v291 = vld [vmem:[%s223 + $0x104] sm:%s216]
                %292 = vst [vmem:[%s224 + $0x84] sm:%s216] %v291
                %v293 = vld [vmem:[%s223 + $0x108] sm:%s216]
                %294 = vst [vmem:[%s224 + $0x88] sm:%s216] %v293
                %v295 = vld [vmem:[%s223 + $0x10c] sm:%s216]
                %296 = vst [vmem:[%s224 + $0x8c] sm:%s216] %v295
                %v297 = vld [vmem:[%s223 + $0x110] sm:%s216]
                %298 = vst [vmem:[%s224 + $0x90] sm:%s216] %v297
                %v299 = vld [vmem:[%s223 + $0x114] sm:%s216]
                %300 = vst [vmem:[%s224 + $0x94] sm:%s216] %v299
                %v301 = vld [vmem:[%s223 + $0x118] sm:%s216]
                %302 = vst [vmem:[%s224 + $0x98] sm:%s216] %v301
                %v303 = vld [vmem:[%s223 + $0x11c] sm:%s216]
                %304 = vst [vmem:[%s224 + $0x9c] sm:%s216] %v303
                %v305 = vld [vmem:[%s223 + $0x120] sm:%s216]
                %306 = vst [vmem:[%s224 + $0xa0] sm:%s216] %v305
                %v307 = vld [vmem:[%s223 + $0x124] sm:%s216]
                %308 = vst [vmem:[%s224 + $0xa4] sm:%s216] %v307
                %v309 = vld [vmem:[%s223 + $0x128] sm:%s216]
                %310 = vst [vmem:[%s224 + $0xa8] sm:%s216] %v309
                %v311 = vld [vmem:[%s223 + $0x12c] sm:%s216]
                %312 = vst [vmem:[%s224 + $0xac] sm:%s216] %v311
                %v313 = vld [vmem:[%s223 + $0x130] sm:%s216]
                %314 = vst [vmem:[%s224 + $0xb0] sm:%s216] %v313
                %v315 = vld [vmem:[%s223 + $0x134] sm:%s216]
                %316 = vst [vmem:[%s224 + $0xb4] sm:%s216] %v315
                %v317 = vld [vmem:[%s223 + $0x138] sm:%s216]
                %318 = vst [vmem:[%s224 + $0xb8] sm:%s216] %v317
                %v319 = vld [vmem:[%s223 + $0x13c] sm:%s216]
                %320 = vst [vmem:[%s224 + $0xbc] sm:%s216] %v319
                %v321 = vld [vmem:[%s223 + $0x180] sm:%s216]
                %322 = vst [vmem:[%s224 + $0xc0] sm:%s216] %v321
                %v323 = vld [vmem:[%s223 + $0x184] sm:%s216]
                %324 = vst [vmem:[%s224 + $0xc4] sm:%s216] %v323
                %v325 = vld [vmem:[%s223 + $0x188] sm:%s216]
                %326 = vst [vmem:[%s224 + $0xc8] sm:%s216] %v325
                %v327 = vld [vmem:[%s223 + $0x18c] sm:%s216]
                %328 = vst [vmem:[%s224 + $0xcc] sm:%s216] %v327
                %v329 = vld [vmem:[%s223 + $0x190] sm:%s216]
                %330 = vst [vmem:[%s224 + $0xd0] sm:%s216] %v329
                %v331 = vld [vmem:[%s223 + $0x194] sm:%s216]
                %332 = vst [vmem:[%s224 + $0xd4] sm:%s216] %v331
                %v333 = vld [vmem:[%s223 + $0x198] sm:%s216]
                %334 = vst [vmem:[%s224 + $0xd8] sm:%s216] %v333
                %v335 = vld [vmem:[%s223 + $0x19c] sm:%s216]
                %336 = vst [vmem:[%s224 + $0xdc] sm:%s216] %v335
                %v337 = vld [vmem:[%s223 + $0x1a0] sm:%s216]
                %338 = vst [vmem:[%s224 + $0xe0] sm:%s216] %v337
                %v339 = vld [vmem:[%s223 + $0x1a4] sm:%s216]
                %340 = vst [vmem:[%s224 + $0xe4] sm:%s216] %v339
                %v341 = vld [vmem:[%s223 + $0x1a8] sm:%s216]
                %342 = vst [vmem:[%s224 + $0xe8] sm:%s216] %v341
                %v343 = vld [vmem:[%s223 + $0x1ac] sm:%s216]
                %344 = vst [vmem:[%s224 + $0xec] sm:%s216] %v343
                %v345 = vld [vmem:[%s223 + $0x1b0] sm:%s216]
                %346 = vst [vmem:[%s224 + $0xf0] sm:%s216] %v345
                %v347 = vld [vmem:[%s223 + $0x1b4] sm:%s216]
                %348 = vst [vmem:[%s224 + $0xf4] sm:%s216] %v347
                %v349 = vld [vmem:[%s223 + $0x1b8] sm:%s216]
                %350 = vst [vmem:[%s224 + $0xf8] sm:%s216] %v349
                %v351 = vld [vmem:[%s223 + $0x1bc] sm:%s216]
                %352 = vst [vmem:[%s224 + $0xfc] sm:%s216] %v351
                %v353 = vld [vmem:[%s223 + $0x200] sm:%s216]
                %354 = vst [vmem:[%s224 + $0x100] sm:%s216] %v353
                %v355 = vld [vmem:[%s223 + $0x204] sm:%s216]
                %356 = vst [vmem:[%s224 + $0x104] sm:%s216] %v355
                %v357 = vld [vmem:[%s223 + $0x208] sm:%s216]
                %358 = vst [vmem:[%s224 + $0x108] sm:%s216] %v357
                %v359 = vld [vmem:[%s223 + $0x20c] sm:%s216]
                %360 = vst [vmem:[%s224 + $0x10c] sm:%s216] %v359
                %v361 = vld [vmem:[%s223 + $0x210] sm:%s216]
                %362 = vst [vmem:[%s224 + $0x110] sm:%s216] %v361
                %v363 = vld [vmem:[%s223 + $0x214] sm:%s216]
                %364 = vst [vmem:[%s224 + $0x114] sm:%s216] %v363
                %v365 = vld [vmem:[%s223 + $0x218] sm:%s216]
                %366 = vst [vmem:[%s224 + $0x118] sm:%s216] %v365
                %v367 = vld [vmem:[%s223 + $0x21c] sm:%s216]
                %368 = vst [vmem:[%s224 + $0x11c] sm:%s216] %v367
                %v369 = vld [vmem:[%s223 + $0x220] sm:%s216]
                %370 = vst [vmem:[%s224 + $0x120] sm:%s216] %v369
                %v371 = vld [vmem:[%s223 + $0x224] sm:%s216]
                %372 = vst [vmem:[%s224 + $0x124] sm:%s216] %v371
                %v373 = vld [vmem:[%s223 + $0x228] sm:%s216]
                %374 = vst [vmem:[%s224 + $0x128] sm:%s216] %v373
                %v375 = vld [vmem:[%s223 + $0x22c] sm:%s216]
                %376 = vst [vmem:[%s224 + $0x12c] sm:%s216] %v375
                %v377 = vld [vmem:[%s223 + $0x230] sm:%s216]
                %378 = vst [vmem:[%s224 + $0x130] sm:%s216] %v377
                %v379 = vld [vmem:[%s223 + $0x234] sm:%s216]
                %380 = vst [vmem:[%s224 + $0x134] sm:%s216] %v379
                %v381 = vld [vmem:[%s223 + $0x238] sm:%s216]
                %382 = vst [vmem:[%s224 + $0x138] sm:%s216] %v381
                %v383 = vld [vmem:[%s223 + $0x23c] sm:%s216]
                %384 = vst [vmem:[%s224 + $0x13c] sm:%s216] %v383
                %v385 = vld [vmem:[%s223 + $0x280] sm:%s216]
                %386 = vst [vmem:[%s224 + $0x140] sm:%s216] %v385
                %v387 = vld [vmem:[%s223 + $0x284] sm:%s216]
                %388 = vst [vmem:[%s224 + $0x144] sm:%s216] %v387
                %v389 = vld [vmem:[%s223 + $0x288] sm:%s216]
                %390 = vst [vmem:[%s224 + $0x148] sm:%s216] %v389
                %v391 = vld [vmem:[%s223 + $0x28c] sm:%s216]
                %392 = vst [vmem:[%s224 + $0x14c] sm:%s216] %v391
                %v393 = vld [vmem:[%s223 + $0x290] sm:%s216]
                %394 = vst [vmem:[%s224 + $0x150] sm:%s216] %v393
                %v395 = vld [vmem:[%s223 + $0x294] sm:%s216]
                %396 = vst [vmem:[%s224 + $0x154] sm:%s216] %v395
                %v397 = vld [vmem:[%s223 + $0x298] sm:%s216]
                %398 = vst [vmem:[%s224 + $0x158] sm:%s216] %v397
                %v399 = vld [vmem:[%s223 + $0x29c] sm:%s216]
                %400 = vst [vmem:[%s224 + $0x15c] sm:%s216] %v399
                %v401 = vld [vmem:[%s223 + $0x2a0] sm:%s216]
                %402 = vst [vmem:[%s224 + $0x160] sm:%s216] %v401
                %v403 = vld [vmem:[%s223 + $0x2a4] sm:%s216]
                %404 = vst [vmem:[%s224 + $0x164] sm:%s216] %v403
                %v405 = vld [vmem:[%s223 + $0x2a8] sm:%s216]
                %406 = vst [vmem:[%s224 + $0x168] sm:%s216] %v405
                %v407 = vld [vmem:[%s223 + $0x2ac] sm:%s216]
                %408 = vst [vmem:[%s224 + $0x16c] sm:%s216] %v407
                %v409 = vld [vmem:[%s223 + $0x2b0] sm:%s216]
                %410 = vst [vmem:[%s224 + $0x170] sm:%s216] %v409
                %v411 = vld [vmem:[%s223 + $0x2b4] sm:%s216]
                %412 = vst [vmem:[%s224 + $0x174] sm:%s216] %v411
                %v413 = vld [vmem:[%s223 + $0x2b8] sm:%s216]
                %414 = vst [vmem:[%s224 + $0x178] sm:%s216] %v413
                %v415 = vld [vmem:[%s223 + $0x2bc] sm:%s216]
                %416 = vst [vmem:[%s224 + $0x17c] sm:%s216] %v415
                %v417 = vld [vmem:[%s223 + $0x300] sm:%s216]
                %418 = vst [vmem:[%s224 + $0x180] sm:%s216] %v417
                %v419 = vld [vmem:[%s223 + $0x304] sm:%s216]
                %420 = vst [vmem:[%s224 + $0x184] sm:%s216] %v419
                %v421 = vld [vmem:[%s223 + $0x308] sm:%s216]
                %422 = vst [vmem:[%s224 + $0x188] sm:%s216] %v421
                %v423 = vld [vmem:[%s223 + $0x30c] sm:%s216]
                %424 = vst [vmem:[%s224 + $0x18c] sm:%s216] %v423
                %v425 = vld [vmem:[%s223 + $0x310] sm:%s216]
                %426 = vst [vmem:[%s224 + $0x190] sm:%s216] %v425
                %v427 = vld [vmem:[%s223 + $0x314] sm:%s216]
                %428 = vst [vmem:[%s224 + $0x194] sm:%s216] %v427
                %v429 = vld [vmem:[%s223 + $0x318] sm:%s216]
                %430 = vst [vmem:[%s224 + $0x198] sm:%s216] %v429
                %v431 = vld [vmem:[%s223 + $0x31c] sm:%s216]
                %432 = vst [vmem:[%s224 + $0x19c] sm:%s216] %v431
                %v433 = vld [vmem:[%s223 + $0x320] sm:%s216]
                %434 = vst [vmem:[%s224 + $0x1a0] sm:%s216] %v433
                %v435 = vld [vmem:[%s223 + $0x324] sm:%s216]
                %436 = vst [vmem:[%s224 + $0x1a4] sm:%s216] %v435
                %v437 = vld [vmem:[%s223 + $0x328] sm:%s216]
                %438 = vst [vmem:[%s224 + $0x1a8] sm:%s216] %v437
                %v439 = vld [vmem:[%s223 + $0x32c] sm:%s216]
                %440 = vst [vmem:[%s224 + $0x1ac] sm:%s216] %v439
                %v441 = vld [vmem:[%s223 + $0x330] sm:%s216]
                %442 = vst [vmem:[%s224 + $0x1b0] sm:%s216] %v441
                %v443 = vld [vmem:[%s223 + $0x334] sm:%s216]
                %444 = vst [vmem:[%s224 + $0x1b4] sm:%s216] %v443
                %v445 = vld [vmem:[%s223 + $0x338] sm:%s216]
                %446 = vst [vmem:[%s224 + $0x1b8] sm:%s216] %v445
                %v447 = vld [vmem:[%s223 + $0x33c] sm:%s216]
                %448 = vst [vmem:[%s224 + $0x1bc] sm:%s216] %v447
                %v449 = vld [vmem:[%s223 + $0x380] sm:%s216]
                %450 = vst [vmem:[%s224 + $0x1c0] sm:%s216] %v449
                %v451 = vld [vmem:[%s223 + $0x384] sm:%s216]
                %452 = vst [vmem:[%s224 + $0x1c4] sm:%s216] %v451
                %v453 = vld [vmem:[%s223 + $0x388] sm:%s216]
                %454 = vst [vmem:[%s224 + $0x1c8] sm:%s216] %v453
                %v455 = vld [vmem:[%s223 + $0x38c] sm:%s216]
                %456 = vst [vmem:[%s224 + $0x1cc] sm:%s216] %v455
                %v457 = vld [vmem:[%s223 + $0x390] sm:%s216]
                %458 = vst [vmem:[%s224 + $0x1d0] sm:%s216] %v457
                %v459 = vld [vmem:[%s223 + $0x394] sm:%s216]
                %460 = vst [vmem:[%s224 + $0x1d4] sm:%s216] %v459
                %v461 = vld [vmem:[%s223 + $0x398] sm:%s216]
                %462 = vst [vmem:[%s224 + $0x1d8] sm:%s216] %v461
                %v463 = vld [vmem:[%s223 + $0x39c] sm:%s216]
                %464 = vst [vmem:[%s224 + $0x1dc] sm:%s216] %v463
                %v465 = vld [vmem:[%s223 + $0x3a0] sm:%s216]
                %466 = vst [vmem:[%s224 + $0x1e0] sm:%s216] %v465
                %v467 = vld [vmem:[%s223 + $0x3a4] sm:%s216]
                %468 = vst [vmem:[%s224 + $0x1e4] sm:%s216] %v467
                %v469 = vld [vmem:[%s223 + $0x3a8] sm:%s216]
                %470 = vst [vmem:[%s224 + $0x1e8] sm:%s216] %v469
                %v471 = vld [vmem:[%s223 + $0x3ac] sm:%s216]
                %472 = vst [vmem:[%s224 + $0x1ec] sm:%s216] %v471
                %v473 = vld [vmem:[%s223 + $0x3b0] sm:%s216]
                %474 = vst [vmem:[%s224 + $0x1f0] sm:%s216] %v473
                %v475 = vld [vmem:[%s223 + $0x3b4] sm:%s216]
                %476 = vst [vmem:[%s224 + $0x1f4] sm:%s216] %v475
                %v477 = vld [vmem:[%s223 + $0x3b8] sm:%s216]
                %478 = vst [vmem:[%s224 + $0x1f8] sm:%s216] %v477
                %v479 = vld [vmem:[%s223 + $0x3bc] sm:%s216]
                %480 = vst [vmem:[%s224 + $0x1fc] sm:%s216] %v479
              $region53: #{tpu_custom_call.1} parent=47 // loop_footer
                %s222 = sadd.s32 1, %s218
              $region54: #{tpu_custom_call.1} parent=47 // loop_footer_branch
                %217 = sbr.rel target = $region50
              $region55: #{tpu_custom_call.1} parent=47 // loop_exit
                _
            $region48: #{tpu_custom_call.1} parent=39 // pred_fallthru
              _
          $region40: #{tpu_custom_call.1} parent=35 // pred_fallthru
            _
          %757 = vnop
        $region36: #{tpu_custom_call.1} parent=31 // pred_fallthru
          _
      $region32: #{tpu_custom_call.1} parent=5 // pred_fallthru
        _
      %p758 = scmp.le.s32.totalorder 1, %s14
      %p759 = scmp.lt.s32.totalorder %s14, 5
      %p760 = pnand %p758, %p759
      %p761 = pneg %p760
      // Predicated region
      $region74: #{tpu_custom_call.1} parent=5 // pred_check
        _
      $region75: #{tpu_custom_call.1} parent=5 // pred_check_branch
        %763 = sbr.rel (%p760) target = $region77
      $region76: #{tpu_custom_call.1} parent=5 // pred_region
        %s764 = ssub.s32 %s14, 1
        %s765 = sand.u32 %s41, 1
        %s766 = sand.u32 %s41, 1
        %s767 = smul.addr %s766, 512
        %s768 = scalar_lea.vmem [#allocation2], %s767
        // Predicated region
        $region78: #{tpu_custom_call.1} parent=76 // pred_check
          %p769 = pneg %p54
        $region79: #{tpu_custom_call.1} parent=76 // pred_check_branch
          %771 = sbr.rel (%p769) target = $region81
        $region80: #{tpu_custom_call.1} parent=76 // pred_region
          _
        $region81: #{tpu_custom_call.1} parent=76 // pred_fallthru
          _
        %s772 = sand.u32 %s41, 1
        %s773 = sand.u32 %s41, 1
        %s774 = smul.addr %s773, 512
        %s775 = scalar_lea.vmem [#allocation2], %s774
        %p776 = pneg %p54
        %p777 = pneg %p51
        %p778 = pneg %p75
        %p779 = pneg %p72
        %p780 = pneg %p96
        %p781 = pneg %p93
        %p782 = pneg %p117
        %p783 = pneg %p114
        %p784 = pneg %p138
        %p785 = pneg %p135
        %p786 = pneg %p166
        %p787 = pneg %p163
        %s788 = sand.u32 %s153, 1
        %s789 = scalar_lea.sflag [#allocation4], %s788
        %s790 = sand.u32 %s153, 1
        %s791 = smul.addr %s790, 32
        %s792 = scalar_lea.vmem [#allocation3], %s791
        %s793 = smul.u32 16, %s24
        %v795 = vld [vmem:[%s768] sm:$0xf]
        %v796 = vld [vmem:[%s768 + $0x4] sm:$0xf]
        %v797 = vld [vmem:[%s768 + $0x8] sm:$0xf]
        %v798 = vld [vmem:[%s768 + $0xc] sm:$0xf]
        %v799 = vld [vmem:[%s768 + $0x10] sm:$0xf]
        %v800 = vld [vmem:[%s768 + $0x14] sm:$0xf]
        %v801 = vld [vmem:[%s768 + $0x18] sm:$0xf]
        %v802 = vld [vmem:[%s768 + $0x1c] sm:$0xf]
        %v803 = vld [vmem:[%s768 + $0x20] sm:$0xf]
        %v804 = vld [vmem:[%s768 + $0x24] sm:$0xf]
        %v805 = vld [vmem:[%s768 + $0x28] sm:$0xf]
        %v806 = vld [vmem:[%s768 + $0x2c] sm:$0xf]
        %v807 = vld [vmem:[%s768 + $0x30] sm:$0xf]
        %v808 = vld [vmem:[%s768 + $0x34] sm:$0xf]
        %v809 = vld [vmem:[%s768 + $0x38] sm:$0xf]
        %v810 = vld [vmem:[%s768 + $0x3c] sm:$0xf]
        %v811 = vld [vmem:[%s768 + $0x40] sm:$0xf]
        %v812 = vld [vmem:[%s768 + $0x44] sm:$0xf]
        %v813 = vld [vmem:[%s768 + $0x48] sm:$0xf]
        %v814 = vld [vmem:[%s768 + $0x4c] sm:$0xf]
        %v815 = vld [vmem:[%s768 + $0x50] sm:$0xf]
        %v816 = vld [vmem:[%s768 + $0x54] sm:$0xf]
        %v817 = vld [vmem:[%s768 + $0x58] sm:$0xf]
        %v818 = vld [vmem:[%s768 + $0x5c] sm:$0xf]
        %v819 = vld [vmem:[%s768 + $0x60] sm:$0xf]
        %v820 = vld [vmem:[%s768 + $0x64] sm:$0xf]
        %v821 = vld [vmem:[%s768 + $0x68] sm:$0xf]
        %v822 = vld [vmem:[%s768 + $0x6c] sm:$0xf]
        %v823 = vld [vmem:[%s768 + $0x70] sm:$0xf]
        %v824 = vld [vmem:[%s768 + $0x74] sm:$0xf]
        %v825 = vld [vmem:[%s768 + $0x78] sm:$0xf]
        %v826 = vld [vmem:[%s768 + $0x7c] sm:$0xf]
        %v827 = vld [vmem:[%s768 + $0x80] sm:$0xf]
        %v828 = vld [vmem:[%s768 + $0x84] sm:$0xf]
        %v829 = vld [vmem:[%s768 + $0x88] sm:$0xf]
        %v830 = vld [vmem:[%s768 + $0x8c] sm:$0xf]
        %v831 = vld [vmem:[%s768 + $0x90] sm:$0xf]
        %v832 = vld [vmem:[%s768 + $0x94] sm:$0xf]
        %v833 = vld [vmem:[%s768 + $0x98] sm:$0xf]
        %v834 = vld [vmem:[%s768 + $0x9c] sm:$0xf]
        %v835 = vld [vmem:[%s768 + $0xa0] sm:$0xf]
        %v836 = vld [vmem:[%s768 + $0xa4] sm:$0xf]
        %v837 = vld [vmem:[%s768 + $0xa8] sm:$0xf]
        %v838 = vld [vmem:[%s768 + $0xac] sm:$0xf]
        %v839 = vld [vmem:[%s768 + $0xb0] sm:$0xf]
        %v840 = vld [vmem:[%s768 + $0xb4] sm:$0xf]
        %v841 = vld [vmem:[%s768 + $0xb8] sm:$0xf]
        %v842 = vld [vmem:[%s768 + $0xbc] sm:$0xf]
        %v843 = vld [vmem:[%s768 + $0xc0] sm:$0xf]
        %v844 = vld [vmem:[%s768 + $0xc4] sm:$0xf]
        %v845 = vld [vmem:[%s768 + $0xc8] sm:$0xf]
        %v846 = vld [vmem:[%s768 + $0xcc] sm:$0xf]
        %v847 = vld [vmem:[%s768 + $0xd0] sm:$0xf]
        %v848 = vld [vmem:[%s768 + $0xd4] sm:$0xf]
        %v849 = vld [vmem:[%s768 + $0xd8] sm:$0xf]
        %v850 = vld [vmem:[%s768 + $0xdc] sm:$0xf]
        %v851 = vld [vmem:[%s768 + $0xe0] sm:$0xf]
        %v852 = vld [vmem:[%s768 + $0xe4] sm:$0xf]
        %v853 = vld [vmem:[%s768 + $0xe8] sm:$0xf]
        %v854 = vld [vmem:[%s768 + $0xec] sm:$0xf]
        %v855 = vld [vmem:[%s768 + $0xf0] sm:$0xf]
        %v856 = vld [vmem:[%s768 + $0xf4] sm:$0xf]
        %v857 = vld [vmem:[%s768 + $0xf8] sm:$0xf]
        %v858 = vld [vmem:[%s768 + $0xfc] sm:$0xf]
        %v859 = vld [vmem:[%s768 + $0x100] sm:$0xf]
        %v860 = vld [vmem:[%s768 + $0x104] sm:$0xf]
        %v861 = vld [vmem:[%s768 + $0x108] sm:$0xf]
        %v862 = vld [vmem:[%s768 + $0x10c] sm:$0xf]
        %v863 = vld [vmem:[%s768 + $0x110] sm:$0xf]
        %v864 = vld [vmem:[%s768 + $0x114] sm:$0xf]
        %v865 = vld [vmem:[%s768 + $0x118] sm:$0xf]
        %v866 = vld [vmem:[%s768 + $0x11c] sm:$0xf]
        %v867 = vld [vmem:[%s768 + $0x120] sm:$0xf]
        %v868 = vld [vmem:[%s768 + $0x124] sm:$0xf]
        %v869 = vld [vmem:[%s768 + $0x128] sm:$0xf]
        %v870 = vld [vmem:[%s768 + $0x12c] sm:$0xf]
        %v871 = vld [vmem:[%s768 + $0x130] sm:$0xf]
        %v872 = vld [vmem:[%s768 + $0x134] sm:$0xf]
        %v873 = vld [vmem:[%s768 + $0x138] sm:$0xf]
        %v874 = vld [vmem:[%s768 + $0x13c] sm:$0xf]
        %v875 = vld [vmem:[%s768 + $0x140] sm:$0xf]
        %v876 = vld [vmem:[%s768 + $0x144] sm:$0xf]
        %v877 = vld [vmem:[%s768 + $0x148] sm:$0xf]
        %v878 = vld [vmem:[%s768 + $0x14c] sm:$0xf]
        %v879 = vld [vmem:[%s768 + $0x150] sm:$0xf]
        %v880 = vld [vmem:[%s768 + $0x154] sm:$0xf]
        %v881 = vld [vmem:[%s768 + $0x158] sm:$0xf]
        %v882 = vld [vmem:[%s768 + $0x15c] sm:$0xf]
        %v883 = vld [vmem:[%s768 + $0x160] sm:$0xf]
        %v884 = vld [vmem:[%s768 + $0x164] sm:$0xf]
        %v885 = vld [vmem:[%s768 + $0x168] sm:$0xf]
        %v886 = vld [vmem:[%s768 + $0x16c] sm:$0xf]
        %v887 = vld [vmem:[%s768 + $0x170] sm:$0xf]
        %v888 = vld [vmem:[%s768 + $0x174] sm:$0xf]
        %v889 = vld [vmem:[%s768 + $0x178] sm:$0xf]
        %v890 = vld [vmem:[%s768 + $0x17c] sm:$0xf]
        %v891 = vld [vmem:[%s768 + $0x180] sm:$0xf]
        %v892 = vld [vmem:[%s768 + $0x184] sm:$0xf]
        %v893 = vld [vmem:[%s768 + $0x188] sm:$0xf]
        %v894 = vld [vmem:[%s768 + $0x18c] sm:$0xf]
        %v895 = vld [vmem:[%s768 + $0x190] sm:$0xf]
        %v896 = vld [vmem:[%s768 + $0x194] sm:$0xf]
        %v897 = vld [vmem:[%s768 + $0x198] sm:$0xf]
        %v898 = vld [vmem:[%s768 + $0x19c] sm:$0xf]
        %v899 = vld [vmem:[%s768 + $0x1a0] sm:$0xf]
        %v900 = vld [vmem:[%s768 + $0x1a4] sm:$0xf]
        %v901 = vld [vmem:[%s768 + $0x1a8] sm:$0xf]
        %v902 = vld [vmem:[%s768 + $0x1ac] sm:$0xf]
        %v903 = vld [vmem:[%s768 + $0x1b0] sm:$0xf]
        %v904 = vld [vmem:[%s768 + $0x1b4] sm:$0xf]
        %v905 = vld [vmem:[%s768 + $0x1b8] sm:$0xf]
        %v906 = vld [vmem:[%s768 + $0x1bc] sm:$0xf]
        %v907 = vld [vmem:[%s768 + $0x1c0] sm:$0xf]
        %v908 = vld [vmem:[%s768 + $0x1c4] sm:$0xf]
        %v909 = vld [vmem:[%s768 + $0x1c8] sm:$0xf]
        %v910 = vld [vmem:[%s768 + $0x1cc] sm:$0xf]
        %v911 = vld [vmem:[%s768 + $0x1d0] sm:$0xf]
        %v912 = vld [vmem:[%s768 + $0x1d4] sm:$0xf]
        %v913 = vld [vmem:[%s768 + $0x1d8] sm:$0xf]
        %v914 = vld [vmem:[%s768 + $0x1dc] sm:$0xf]
        %v915 = vld [vmem:[%s768 + $0x1e0] sm:$0xf]
        %v916 = vld [vmem:[%s768 + $0x1e4] sm:$0xf]
        %v917 = vld [vmem:[%s768 + $0x1e8] sm:$0xf]
        %v918 = vld [vmem:[%s768 + $0x1ec] sm:$0xf]
        %v919 = vld [vmem:[%s768 + $0x1f0] sm:$0xf]
        %v920 = vld [vmem:[%s768 + $0x1f4] sm:$0xf]
        %v921 = vld [vmem:[%s768 + $0x1f8] sm:$0xf]
        %v922 = vld [vmem:[%s768 + $0x1fc] sm:$0xf]
        %v923 = vld [vmem:[%s1] sm:$0xf]
        %v924 = vld [vmem:[%s2] sm:$0x1]
        %v926 = vperm.slane %v924, 0
        %v1056 = vunpack.c.l.b16 %v795
        %v1057 = vunpack.c.l.b16 %v796
        %v1058 = vunpack.c.l.b16 %v797
        %v1059 = vunpack.c.l.b16 %v798
        %v1060 = vunpack.c.l.b16 %v799
        %v1061 = vunpack.c.l.b16 %v800
        %v1062 = vunpack.c.l.b16 %v801
        %v1063 = vunpack.c.l.b16 %v802
        %v1064 = vunpack.c.l.b16 %v803
        %v1065 = vunpack.c.l.b16 %v804
        %v1066 = vunpack.c.l.b16 %v805
        %v1067 = vunpack.c.l.b16 %v806
        %v1068 = vunpack.c.l.b16 %v807
        %v1069 = vunpack.c.l.b16 %v808
        %v1070 = vunpack.c.l.b16 %v809
        %v1071 = vunpack.c.l.b16 %v810
        %v1072 = vunpack.c.l.b16 %v811
        %v1073 = vunpack.c.l.b16 %v812
        %v1074 = vunpack.c.l.b16 %v813
        %v1075 = vunpack.c.l.b16 %v814
        %v1076 = vunpack.c.l.b16 %v815
        %v1077 = vunpack.c.l.b16 %v816
        %v1078 = vunpack.c.l.b16 %v817
        %v1079 = vunpack.c.l.b16 %v818
        %v1080 = vunpack.c.l.b16 %v819
        %v1081 = vunpack.c.l.b16 %v820
        %v1082 = vunpack.c.l.b16 %v821
        %v1083 = vunpack.c.l.b16 %v822
        %v1084 = vunpack.c.l.b16 %v823
        %v1085 = vunpack.c.l.b16 %v824
        %v1086 = vunpack.c.l.b16 %v825
        %v1087 = vunpack.c.l.b16 %v826
        %v1088 = vunpack.c.l.b16 %v827
        %v1089 = vunpack.c.l.b16 %v828
        %v1090 = vunpack.c.l.b16 %v829
        %v1091 = vunpack.c.l.b16 %v830
        %v1092 = vunpack.c.l.b16 %v831
        %v1093 = vunpack.c.l.b16 %v832
        %v1094 = vunpack.c.l.b16 %v833
        %v1095 = vunpack.c.l.b16 %v834
        %v1096 = vunpack.c.l.b16 %v835
        %v1097 = vunpack.c.l.b16 %v836
        %v1098 = vunpack.c.l.b16 %v837
        %v1099 = vunpack.c.l.b16 %v838
        %v1100 = vunpack.c.l.b16 %v839
        %v1101 = vunpack.c.l.b16 %v840
        %v1102 = vunpack.c.l.b16 %v841
        %v1103 = vunpack.c.l.b16 %v842
        %v1104 = vunpack.c.l.b16 %v843
        %v1105 = vunpack.c.l.b16 %v844
        %v1106 = vunpack.c.l.b16 %v845
        %v1107 = vunpack.c.l.b16 %v846
        %v1108 = vunpack.c.l.b16 %v847
        %v1109 = vunpack.c.l.b16 %v848
        %v1110 = vunpack.c.l.b16 %v849
        %v1111 = vunpack.c.l.b16 %v850
        %v1112 = vunpack.c.l.b16 %v851
        %v1113 = vunpack.c.l.b16 %v852
        %v1114 = vunpack.c.l.b16 %v853
        %v1115 = vunpack.c.l.b16 %v854
        %v1116 = vunpack.c.l.b16 %v855
        %v1117 = vunpack.c.l.b16 %v856
        %v1118 = vunpack.c.l.b16 %v857
        %v1119 = vunpack.c.l.b16 %v858
        %v1120 = vunpack.c.l.b16 %v859
        %v1121 = vunpack.c.l.b16 %v860
        %v1122 = vunpack.c.l.b16 %v861
        %v1123 = vunpack.c.l.b16 %v862
        %v1124 = vunpack.c.l.b16 %v863
        %v1125 = vunpack.c.l.b16 %v864
        %v1126 = vunpack.c.l.b16 %v865
        %v1127 = vunpack.c.l.b16 %v866
        %v1128 = vunpack.c.l.b16 %v867
        %v1129 = vunpack.c.l.b16 %v868
        %v1130 = vunpack.c.l.b16 %v869
        %v1131 = vunpack.c.l.b16 %v870
        %v1132 = vunpack.c.l.b16 %v871
        %v1133 = vunpack.c.l.b16 %v872
        %v1134 = vunpack.c.l.b16 %v873
        %v1135 = vunpack.c.l.b16 %v874
        %v1136 = vunpack.c.l.b16 %v875
        %v1137 = vunpack.c.l.b16 %v876
        %v1138 = vunpack.c.l.b16 %v877
        %v1139 = vunpack.c.l.b16 %v878
        %v1140 = vunpack.c.l.b16 %v879
        %v1141 = vunpack.c.l.b16 %v880
        %v1142 = vunpack.c.l.b16 %v881
        %v1143 = vunpack.c.l.b16 %v882
        %v1144 = vunpack.c.l.b16 %v883
        %v1145 = vunpack.c.l.b16 %v884
        %v1146 = vunpack.c.l.b16 %v885
        %v1147 = vunpack.c.l.b16 %v886
        %v1148 = vunpack.c.l.b16 %v887
        %v1149 = vunpack.c.l.b16 %v888
        %v1150 = vunpack.c.l.b16 %v889
        %v1151 = vunpack.c.l.b16 %v890
        %v1152 = vunpack.c.l.b16 %v891
        %v1153 = vunpack.c.l.b16 %v892
        %v1154 = vunpack.c.l.b16 %v893
        %v1155 = vunpack.c.l.b16 %v894
        %v1156 = vunpack.c.l.b16 %v895
        %v1157 = vunpack.c.l.b16 %v896
        %v1158 = vunpack.c.l.b16 %v897
        %v1159 = vunpack.c.l.b16 %v898
        %v1160 = vunpack.c.l.b16 %v899
        %v1161 = vunpack.c.l.b16 %v900
        %v1162 = vunpack.c.l.b16 %v901
        %v1163 = vunpack.c.l.b16 %v902
        %v1164 = vunpack.c.l.b16 %v903
        %v1165 = vunpack.c.l.b16 %v904
        %v1166 = vunpack.c.l.b16 %v905
        %v1167 = vunpack.c.l.b16 %v906
        %v1168 = vunpack.c.l.b16 %v907
        %v1169 = vunpack.c.l.b16 %v908
        %v1170 = vunpack.c.l.b16 %v909
        %v1171 = vunpack.c.l.b16 %v910
        %v1172 = vunpack.c.l.b16 %v911
        %v1173 = vunpack.c.l.b16 %v912
        %v1174 = vunpack.c.l.b16 %v913
        %v1175 = vunpack.c.l.b16 %v914
        %v1176 = vunpack.c.l.b16 %v915
        %v1177 = vunpack.c.l.b16 %v916
        %v1178 = vunpack.c.l.b16 %v917
        %v1179 = vunpack.c.l.b16 %v918
        %v1180 = vunpack.c.l.b16 %v919
        %v1181 = vunpack.c.l.b16 %v920
        %v1182 = vunpack.c.l.b16 %v921
        %v1183 = vunpack.c.l.b16 %v922
        %v1184 = vpack.c.b16 %v1057, %v1056
        %v1185 = vpack.c.b16 %v1059, %v1058
        %v1186 = vpack.c.b16 %v1061, %v1060
        %v1187 = vpack.c.b16 %v1063, %v1062
        %v1188 = vpack.c.b16 %v1065, %v1064
        %v1189 = vpack.c.b16 %v1067, %v1066
        %v1190 = vpack.c.b16 %v1069, %v1068
        %v1191 = vpack.c.b16 %v1071, %v1070
        %v1192 = vpack.c.b16 %v1073, %v1072
        %v1193 = vpack.c.b16 %v1075, %v1074
        %v1194 = vpack.c.b16 %v1077, %v1076
        %v1195 = vpack.c.b16 %v1079, %v1078
        %v1196 = vpack.c.b16 %v1081, %v1080
        %v1197 = vpack.c.b16 %v1083, %v1082
        %v1198 = vpack.c.b16 %v1085, %v1084
        %v1199 = vpack.c.b16 %v1087, %v1086
        %v1200 = vpack.c.b16 %v1089, %v1088
        %v1201 = vpack.c.b16 %v1091, %v1090
        %v1202 = vpack.c.b16 %v1093, %v1092
        %v1203 = vpack.c.b16 %v1095, %v1094
        %v1204 = vpack.c.b16 %v1097, %v1096
        %v1205 = vpack.c.b16 %v1099, %v1098
        %v1206 = vpack.c.b16 %v1101, %v1100
        %v1207 = vpack.c.b16 %v1103, %v1102
        %v1208 = vpack.c.b16 %v1105, %v1104
        %v1209 = vpack.c.b16 %v1107, %v1106
        %v1210 = vpack.c.b16 %v1109, %v1108
        %v1211 = vpack.c.b16 %v1111, %v1110
        %v1212 = vpack.c.b16 %v1113, %v1112
        %v1213 = vpack.c.b16 %v1115, %v1114
        %v1214 = vpack.c.b16 %v1117, %v1116
        %v1215 = vpack.c.b16 %v1119, %v1118
        %v1216 = vpack.c.b16 %v1121, %v1120
        %v1217 = vpack.c.b16 %v1123, %v1122
        %v1218 = vpack.c.b16 %v1125, %v1124
        %v1219 = vpack.c.b16 %v1127, %v1126
        %v1220 = vpack.c.b16 %v1129, %v1128
        %v1221 = vpack.c.b16 %v1131, %v1130
        %v1222 = vpack.c.b16 %v1133, %v1132
        %v1223 = vpack.c.b16 %v1135, %v1134
        %v1224 = vpack.c.b16 %v1137, %v1136
        %v1225 = vpack.c.b16 %v1139, %v1138
        %v1226 = vpack.c.b16 %v1141, %v1140
        %v1227 = vpack.c.b16 %v1143, %v1142
        %v1228 = vpack.c.b16 %v1145, %v1144
        %v1229 = vpack.c.b16 %v1147, %v1146
        %v1230 = vpack.c.b16 %v1149, %v1148
        %v1231 = vpack.c.b16 %v1151, %v1150
        %v1232 = vpack.c.b16 %v1153, %v1152
        %v1233 = vpack.c.b16 %v1155, %v1154
        %v1234 = vpack.c.b16 %v1157, %v1156
        %v1235 = vpack.c.b16 %v1159, %v1158
        %v1236 = vpack.c.b16 %v1161, %v1160
        %v1237 = vpack.c.b16 %v1163, %v1162
        %v1238 = vpack.c.b16 %v1165, %v1164
        %v1239 = vpack.c.b16 %v1167, %v1166
        %v1240 = vpack.c.b16 %v1169, %v1168
        %v1241 = vpack.c.b16 %v1171, %v1170
        %v1242 = vpack.c.b16 %v1173, %v1172
        %v1243 = vpack.c.b16 %v1175, %v1174
        %v1244 = vpack.c.b16 %v1177, %v1176
        %v1245 = vpack.c.b16 %v1179, %v1178
        %v1246 = vpack.c.b16 %v1181, %v1180
        %v1247 = vpack.c.b16 %v1183, %v1182
        %vm1248 = vcmask 56320
        %v1250 = vsel %vm1248, %v1184, 0
        %v1253 = vsel %vm1248, %v1185, 0
        %v1256 = vsel %vm1248, %v1186, 0
        %v1259 = vsel %vm1248, %v1187, 0
        %v1262 = vsel %vm1248, %v1188, 0
        %v1265 = vsel %vm1248, %v1189, 0
        %v1268 = vsel %vm1248, %v1190, 0
        %v1271 = vsel %vm1248, %v1191, 0
        %v1274 = vsel %vm1248, %v1192, 0
        %v1277 = vsel %vm1248, %v1193, 0
        %v1280 = vsel %vm1248, %v1194, 0
        %v1283 = vsel %vm1248, %v1195, 0
        %v1286 = vsel %vm1248, %v1196, 0
        %v1289 = vsel %vm1248, %v1197, 0
        %v1292 = vsel %vm1248, %v1198, 0
        %v1295 = vsel %vm1248, %v1199, 0
        %v1298 = vsel %vm1248, %v1200, 0
        %v1301 = vsel %vm1248, %v1201, 0
        %v1304 = vsel %vm1248, %v1202, 0
        %v1307 = vsel %vm1248, %v1203, 0
        %v1310 = vsel %vm1248, %v1204, 0
        %v1313 = vsel %vm1248, %v1205, 0
        %v1316 = vsel %vm1248, %v1206, 0
        %v1319 = vsel %vm1248, %v1207, 0
        %v1322 = vsel %vm1248, %v1208, 0
        %v1325 = vsel %vm1248, %v1209, 0
        %v1328 = vsel %vm1248, %v1210, 0
        %v1331 = vsel %vm1248, %v1211, 0
        %v1334 = vsel %vm1248, %v1212, 0
        %v1337 = vsel %vm1248, %v1213, 0
        %v1340 = vsel %vm1248, %v1214, 0
        %v1343 = vsel %vm1248, %v1215, 0
        %v1346 = vsel %vm1248, %v1216, 0
        %v1349 = vsel %vm1248, %v1217, 0
        %v1352 = vsel %vm1248, %v1218, 0
        %v1355 = vsel %vm1248, %v1219, 0
        %v1358 = vsel %vm1248, %v1220, 0
        %v1361 = vsel %vm1248, %v1221, 0
        %v1364 = vsel %vm1248, %v1222, 0
        %v1367 = vsel %vm1248, %v1223, 0
        %v1370 = vsel %vm1248, %v1224, 0
        %v1373 = vsel %vm1248, %v1225, 0
        %v1376 = vsel %vm1248, %v1226, 0
        %v1379 = vsel %vm1248, %v1227, 0
        %v1382 = vsel %vm1248, %v1228, 0
        %v1385 = vsel %vm1248, %v1229, 0
        %v1388 = vsel %vm1248, %v1230, 0
        %v1391 = vsel %vm1248, %v1231, 0
        %v1394 = vsel %vm1248, %v1232, 0
        %v1397 = vsel %vm1248, %v1233, 0
        %v1400 = vsel %vm1248, %v1234, 0
        %v1403 = vsel %vm1248, %v1235, 0
        %v1406 = vsel %vm1248, %v1236, 0
        %v1409 = vsel %vm1248, %v1237, 0
        %v1412 = vsel %vm1248, %v1238, 0
        %v1415 = vsel %vm1248, %v1239, 0
        %v1418 = vsel %vm1248, %v1240, 0
        %v1421 = vsel %vm1248, %v1241, 0
        %v1424 = vsel %vm1248, %v1242, 0
        %v1427 = vsel %vm1248, %v1243, 0
        %v1430 = vsel %vm1248, %v1244, 0
        %v1433 = vsel %vm1248, %v1245, 0
        %v1436 = vsel %vm1248, %v1246, 0
        %v1439 = vsel %vm1248, %v1247, 0
        %vm1441 = vcmask 1042432
        %vm1442 = vcmask 1043456
        %v1443 = vsel %vm1441, 4294967295, 65535
        %v1444 = vsel %vm1442, %v1443, 0
        %v1446 = vand.u32 %v923, %v1444
        %1448 = vmatpush.bf16.msra.mxu0 0
        %1449 = vmatpush.bf16.msra.mxu0 0
        %1450 = vmatpush.bf16.msra.mxu0 0
        %1451 = vmatpush.bf16.msra.mxu0 0
        %1452 = vmatpush.bf16.msra.mxu0 0
        %1453 = vmatpush.bf16.msra.mxu0 0
        %1454 = vmatpush.bf16.msra.mxu0 0
        %1455 = vmatpush.bf16.msra.mxu0 %v1446
        %1456 = vmatmul.bf16.gmra.mxu0 %v1250
        %v1457 = vpop.f32.mrf.mxu0
        %v1458 = vadd.f32 %v926, %v1457
        %v1459 = vpop.f32.mrf.mxu0
        %v1460 = vadd.f32 %v926, %v1459
        %1461 = vmatmul.bf16.gmra.mxu0 %v1253
        %v1462 = vpop.f32.mrf.mxu0
        %v1463 = vadd.f32 %v926, %v1462
        %v1464 = vpop.f32.mrf.mxu0
        %v1465 = vadd.f32 %v926, %v1464
        %1466 = vmatmul.bf16.gmra.mxu0 %v1256
        %v1467 = vpop.f32.mrf.mxu0
        %v1468 = vadd.f32 %v926, %v1467
        %v1469 = vpop.f32.mrf.mxu0
        %v1470 = vadd.f32 %v926, %v1469
        %1471 = vmatmul.bf16.gmra.mxu0 %v1259
        %v1472 = vpop.f32.mrf.mxu0
        %v1473 = vadd.f32 %v926, %v1472
        %v1474 = vpop.f32.mrf.mxu0
        %v1475 = vadd.f32 %v926, %v1474
        %1476 = vmatmul.bf16.gmra.mxu0 %v1262
        %v1477 = vpop.f32.mrf.mxu0
        %v1478 = vadd.f32 %v926, %v1477
        %v1479 = vpop.f32.mrf.mxu0
        %v1480 = vadd.f32 %v926, %v1479
        %1481 = vmatmul.bf16.gmra.mxu0 %v1265
        %v1482 = vpop.f32.mrf.mxu0
        %v1483 = vadd.f32 %v926, %v1482
        %v1484 = vpop.f32.mrf.mxu0
        %v1485 = vadd.f32 %v926, %v1484
        %1486 = vmatmul.bf16.gmra.mxu0 %v1268
        %v1487 = vpop.f32.mrf.mxu0
        %v1488 = vadd.f32 %v926, %v1487
        %v1489 = vpop.f32.mrf.mxu0
        %v1490 = vadd.f32 %v926, %v1489
        %1491 = vmatmul.bf16.gmra.mxu0 %v1271
        %v1492 = vpop.f32.mrf.mxu0
        %v1493 = vadd.f32 %v926, %v1492
        %v1494 = vpop.f32.mrf.mxu0
        %v1495 = vadd.f32 %v926, %v1494
        %1496 = vmatmul.bf16.gmra.mxu0 %v1274
        %v1497 = vpop.f32.mrf.mxu0
        %v1498 = vadd.f32 %v926, %v1497
        %v1499 = vpop.f32.mrf.mxu0
        %v1500 = vadd.f32 %v926, %v1499
        %1501 = vmatmul.bf16.gmra.mxu0 %v1277
        %v1502 = vpop.f32.mrf.mxu0
        %v1503 = vadd.f32 %v926, %v1502
        %v1504 = vpop.f32.mrf.mxu0
        %v1505 = vadd.f32 %v926, %v1504
        %1506 = vmatmul.bf16.gmra.mxu0 %v1280
        %v1507 = vpop.f32.mrf.mxu0
        %v1508 = vadd.f32 %v926, %v1507
        %v1509 = vpop.f32.mrf.mxu0
        %v1510 = vadd.f32 %v926, %v1509
        %1511 = vmatmul.bf16.gmra.mxu0 %v1283
        %v1512 = vpop.f32.mrf.mxu0
        %v1513 = vadd.f32 %v926, %v1512
        %v1514 = vpop.f32.mrf.mxu0
        %v1515 = vadd.f32 %v926, %v1514
        %1516 = vmatmul.bf16.gmra.mxu0 %v1286
        %v1517 = vpop.f32.mrf.mxu0
        %v1518 = vadd.f32 %v926, %v1517
        %v1519 = vpop.f32.mrf.mxu0
        %v1520 = vadd.f32 %v926, %v1519
        %1521 = vmatmul.bf16.gmra.mxu0 %v1289
        %v1522 = vpop.f32.mrf.mxu0
        %v1523 = vadd.f32 %v926, %v1522
        %v1524 = vpop.f32.mrf.mxu0
        %v1525 = vadd.f32 %v926, %v1524
        %1526 = vmatmul.bf16.gmra.mxu0 %v1292
        %v1527 = vpop.f32.mrf.mxu0
        %v1528 = vadd.f32 %v926, %v1527
        %v1529 = vpop.f32.mrf.mxu0
        %v1530 = vadd.f32 %v926, %v1529
        %1531 = vmatmul.bf16.gmra.mxu0 %v1295
        %v1532 = vpop.f32.mrf.mxu0
        %v1533 = vadd.f32 %v926, %v1532
        %v1534 = vpop.f32.mrf.mxu0
        %v1535 = vadd.f32 %v926, %v1534
        %1536 = vmatmul.bf16.gmra.mxu0 %v1298
        %v1537 = vpop.f32.mrf.mxu0
        %v1538 = vadd.f32 %v926, %v1537
        %v1539 = vpop.f32.mrf.mxu0
        %v1540 = vadd.f32 %v926, %v1539
        %1541 = vmatmul.bf16.gmra.mxu0 %v1301
        %v1542 = vpop.f32.mrf.mxu0
        %v1543 = vadd.f32 %v926, %v1542
        %v1544 = vpop.f32.mrf.mxu0
        %v1545 = vadd.f32 %v926, %v1544
        %1546 = vmatmul.bf16.gmra.mxu0 %v1304
        %v1547 = vpop.f32.mrf.mxu0
        %v1548 = vadd.f32 %v926, %v1547
        %v1549 = vpop.f32.mrf.mxu0
        %v1550 = vadd.f32 %v926, %v1549
        %1551 = vmatmul.bf16.gmra.mxu0 %v1307
        %v1552 = vpop.f32.mrf.mxu0
        %v1553 = vadd.f32 %v926, %v1552
        %v1554 = vpop.f32.mrf.mxu0
        %v1555 = vadd.f32 %v926, %v1554
        %1556 = vmatmul.bf16.gmra.mxu0 %v1310
        %v1557 = vpop.f32.mrf.mxu0
        %v1558 = vadd.f32 %v926, %v1557
        %v1559 = vpop.f32.mrf.mxu0
        %v1560 = vadd.f32 %v926, %v1559
        %1561 = vmatmul.bf16.gmra.mxu0 %v1313
        %v1562 = vpop.f32.mrf.mxu0
        %v1563 = vadd.f32 %v926, %v1562
        %v1564 = vpop.f32.mrf.mxu0
        %v1565 = vadd.f32 %v926, %v1564
        %1566 = vmatmul.bf16.gmra.mxu0 %v1316
        %v1567 = vpop.f32.mrf.mxu0
        %v1568 = vadd.f32 %v926, %v1567
        %v1569 = vpop.f32.mrf.mxu0
        %v1570 = vadd.f32 %v926, %v1569
        %1571 = vmatmul.bf16.gmra.mxu0 %v1319
        %v1572 = vpop.f32.mrf.mxu0
        %v1573 = vadd.f32 %v926, %v1572
        %v1574 = vpop.f32.mrf.mxu0
        %v1575 = vadd.f32 %v926, %v1574
        %1576 = vmatmul.bf16.gmra.mxu0 %v1322
        %v1577 = vpop.f32.mrf.mxu0
        %v1578 = vadd.f32 %v926, %v1577
        %v1579 = vpop.f32.mrf.mxu0
        %v1580 = vadd.f32 %v926, %v1579
        %1581 = vmatmul.bf16.gmra.mxu0 %v1325
        %v1582 = vpop.f32.mrf.mxu0
        %v1583 = vadd.f32 %v926, %v1582
        %v1584 = vpop.f32.mrf.mxu0
        %v1585 = vadd.f32 %v926, %v1584
        %1586 = vmatmul.bf16.gmra.mxu0 %v1328
        %v1587 = vpop.f32.mrf.mxu0
        %v1588 = vadd.f32 %v926, %v1587
        %v1589 = vpop.f32.mrf.mxu0
        %v1590 = vadd.f32 %v926, %v1589
        %1591 = vmatmul.bf16.gmra.mxu0 %v1331
        %v1592 = vpop.f32.mrf.mxu0
        %v1593 = vadd.f32 %v926, %v1592
        %v1594 = vpop.f32.mrf.mxu0
        %v1595 = vadd.f32 %v926, %v1594
        %1596 = vmatmul.bf16.gmra.mxu0 %v1334
        %v1597 = vpop.f32.mrf.mxu0
        %v1598 = vadd.f32 %v926, %v1597
        %v1599 = vpop.f32.mrf.mxu0
        %v1600 = vadd.f32 %v926, %v1599
        %1601 = vmatmul.bf16.gmra.mxu0 %v1337
        %v1602 = vpop.f32.mrf.mxu0
        %v1603 = vadd.f32 %v926, %v1602
        %v1604 = vpop.f32.mrf.mxu0
        %v1605 = vadd.f32 %v926, %v1604
        %1606 = vmatmul.bf16.gmra.mxu0 %v1340
        %v1607 = vpop.f32.mrf.mxu0
        %v1608 = vadd.f32 %v926, %v1607
        %v1609 = vpop.f32.mrf.mxu0
        %v1610 = vadd.f32 %v926, %v1609
        %1611 = vmatmul.bf16.gmra.mxu0 %v1343
        %v1612 = vpop.f32.mrf.mxu0
        %v1613 = vadd.f32 %v926, %v1612
        %v1614 = vpop.f32.mrf.mxu0
        %v1615 = vadd.f32 %v926, %v1614
        %1616 = vmatmul.bf16.gmra.mxu0 %v1346
        %v1617 = vpop.f32.mrf.mxu0
        %v1618 = vadd.f32 %v926, %v1617
        %v1619 = vpop.f32.mrf.mxu0
        %v1620 = vadd.f32 %v926, %v1619
        %1621 = vmatmul.bf16.gmra.mxu0 %v1349
        %v1622 = vpop.f32.mrf.mxu0
        %v1623 = vadd.f32 %v926, %v1622
        %v1624 = vpop.f32.mrf.mxu0
        %v1625 = vadd.f32 %v926, %v1624
        %1626 = vmatmul.bf16.gmra.mxu0 %v1352
        %v1627 = vpop.f32.mrf.mxu0
        %v1628 = vadd.f32 %v926, %v1627
        %v1629 = vpop.f32.mrf.mxu0
        %v1630 = vadd.f32 %v926, %v1629
        %1631 = vmatmul.bf16.gmra.mxu0 %v1355
        %v1632 = vpop.f32.mrf.mxu0
        %v1633 = vadd.f32 %v926, %v1632
        %v1634 = vpop.f32.mrf.mxu0
        %v1635 = vadd.f32 %v926, %v1634
        %1636 = vmatmul.bf16.gmra.mxu0 %v1358
        %v1637 = vpop.f32.mrf.mxu0
        %v1638 = vadd.f32 %v926, %v1637
        %v1639 = vpop.f32.mrf.mxu0
        %v1640 = vadd.f32 %v926, %v1639
        %1641 = vmatmul.bf16.gmra.mxu0 %v1361
        %v1642 = vpop.f32.mrf.mxu0
        %v1643 = vadd.f32 %v926, %v1642
        %v1644 = vpop.f32.mrf.mxu0
        %v1645 = vadd.f32 %v926, %v1644
        %1646 = vmatmul.bf16.gmra.mxu0 %v1364
        %v1647 = vpop.f32.mrf.mxu0
        %v1648 = vadd.f32 %v926, %v1647
        %v1649 = vpop.f32.mrf.mxu0
        %v1650 = vadd.f32 %v926, %v1649
        %1651 = vmatmul.bf16.gmra.mxu0 %v1367
        %v1652 = vpop.f32.mrf.mxu0
        %v1653 = vadd.f32 %v926, %v1652
        %v1654 = vpop.f32.mrf.mxu0
        %v1655 = vadd.f32 %v926, %v1654
        %1656 = vmatmul.bf16.gmra.mxu0 %v1370
        %v1657 = vpop.f32.mrf.mxu0
        %v1658 = vadd.f32 %v926, %v1657
        %v1659 = vpop.f32.mrf.mxu0
        %v1660 = vadd.f32 %v926, %v1659
        %1661 = vmatmul.bf16.gmra.mxu0 %v1373
        %v1662 = vpop.f32.mrf.mxu0
        %v1663 = vadd.f32 %v926, %v1662
        %v1664 = vpop.f32.mrf.mxu0
        %v1665 = vadd.f32 %v926, %v1664
        %1666 = vmatmul.bf16.gmra.mxu0 %v1376
        %v1667 = vpop.f32.mrf.mxu0
        %v1668 = vadd.f32 %v926, %v1667
        %v1669 = vpop.f32.mrf.mxu0
        %v1670 = vadd.f32 %v926, %v1669
        %1671 = vmatmul.bf16.gmra.mxu0 %v1379
        %v1672 = vpop.f32.mrf.mxu0
        %v1673 = vadd.f32 %v926, %v1672
        %v1674 = vpop.f32.mrf.mxu0
        %v1675 = vadd.f32 %v926, %v1674
        %1676 = vmatmul.bf16.gmra.mxu0 %v1382
        %v1677 = vpop.f32.mrf.mxu0
        %v1678 = vadd.f32 %v926, %v1677
        %v1679 = vpop.f32.mrf.mxu0
        %v1680 = vadd.f32 %v926, %v1679
        %1681 = vmatmul.bf16.gmra.mxu0 %v1385
        %v1682 = vpop.f32.mrf.mxu0
        %v1683 = vadd.f32 %v926, %v1682
        %v1684 = vpop.f32.mrf.mxu0
        %v1685 = vadd.f32 %v926, %v1684
        %1686 = vmatmul.bf16.gmra.mxu0 %v1388
        %v1687 = vpop.f32.mrf.mxu0
        %v1688 = vadd.f32 %v926, %v1687
        %v1689 = vpop.f32.mrf.mxu0
        %v1690 = vadd.f32 %v926, %v1689
        %1691 = vmatmul.bf16.gmra.mxu0 %v1391
        %v1692 = vpop.f32.mrf.mxu0
        %v1693 = vadd.f32 %v926, %v1692
        %v1694 = vpop.f32.mrf.mxu0
        %v1695 = vadd.f32 %v926, %v1694
        %1696 = vmatmul.bf16.gmra.mxu0 %v1394
        %v1697 = vpop.f32.mrf.mxu0
        %v1698 = vadd.f32 %v926, %v1697
        %v1699 = vpop.f32.mrf.mxu0
        %v1700 = vadd.f32 %v926, %v1699
        %1701 = vmatmul.bf16.gmra.mxu0 %v1397
        %v1702 = vpop.f32.mrf.mxu0
        %v1703 = vadd.f32 %v926, %v1702
        %v1704 = vpop.f32.mrf.mxu0
        %v1705 = vadd.f32 %v926, %v1704
        %1706 = vmatmul.bf16.gmra.mxu0 %v1400
        %v1707 = vpop.f32.mrf.mxu0
        %v1708 = vadd.f32 %v926, %v1707
        %v1709 = vpop.f32.mrf.mxu0
        %v1710 = vadd.f32 %v926, %v1709
        %1711 = vmatmul.bf16.gmra.mxu0 %v1403
        %v1712 = vpop.f32.mrf.mxu0
        %v1713 = vadd.f32 %v926, %v1712
        %v1714 = vpop.f32.mrf.mxu0
        %v1715 = vadd.f32 %v926, %v1714
        %1716 = vmatmul.bf16.gmra.mxu0 %v1406
        %v1717 = vpop.f32.mrf.mxu0
        %v1718 = vadd.f32 %v926, %v1717
        %v1719 = vpop.f32.mrf.mxu0
        %v1720 = vadd.f32 %v926, %v1719
        %1721 = vmatmul.bf16.gmra.mxu0 %v1409
        %v1722 = vpop.f32.mrf.mxu0
        %v1723 = vadd.f32 %v926, %v1722
        %v1724 = vpop.f32.mrf.mxu0
        %v1725 = vadd.f32 %v926, %v1724
        %1726 = vmatmul.bf16.gmra.mxu0 %v1412
        %v1727 = vpop.f32.mrf.mxu0
        %v1728 = vadd.f32 %v926, %v1727
        %v1729 = vpop.f32.mrf.mxu0
        %v1730 = vadd.f32 %v926, %v1729
        %1731 = vmatmul.bf16.gmra.mxu0 %v1415
        %v1732 = vpop.f32.mrf.mxu0
        %v1733 = vadd.f32 %v926, %v1732
        %v1734 = vpop.f32.mrf.mxu0
        %v1735 = vadd.f32 %v926, %v1734
        %1736 = vmatmul.bf16.gmra.mxu0 %v1418
        %v1737 = vpop.f32.mrf.mxu0
        %v1738 = vadd.f32 %v926, %v1737
        %v1739 = vpop.f32.mrf.mxu0
        %v1740 = vadd.f32 %v926, %v1739
        %1741 = vmatmul.bf16.gmra.mxu0 %v1421
        %v1742 = vpop.f32.mrf.mxu0
        %v1743 = vadd.f32 %v926, %v1742
        %v1744 = vpop.f32.mrf.mxu0
        %v1745 = vadd.f32 %v926, %v1744
        %1746 = vmatmul.bf16.gmra.mxu0 %v1424
        %v1747 = vpop.f32.mrf.mxu0
        %v1748 = vadd.f32 %v926, %v1747
        %v1749 = vpop.f32.mrf.mxu0
        %v1750 = vadd.f32 %v926, %v1749
        %1751 = vmatmul.bf16.gmra.mxu0 %v1427
        %v1752 = vpop.f32.mrf.mxu0
        %v1753 = vadd.f32 %v926, %v1752
        %v1754 = vpop.f32.mrf.mxu0
        %v1755 = vadd.f32 %v926, %v1754
        %1756 = vmatmul.bf16.gmra.mxu0 %v1430
        %v1757 = vpop.f32.mrf.mxu0
        %v1758 = vadd.f32 %v926, %v1757
        %v1759 = vpop.f32.mrf.mxu0
        %v1760 = vadd.f32 %v926, %v1759
        %1761 = vmatmul.bf16.gmra.mxu0 %v1433
        %v1762 = vpop.f32.mrf.mxu0
        %v1763 = vadd.f32 %v926, %v1762
        %v1764 = vpop.f32.mrf.mxu0
        %v1765 = vadd.f32 %v926, %v1764
        %1766 = vmatmul.bf16.gmra.mxu0 %v1436
        %v1767 = vpop.f32.mrf.mxu0
        %v1768 = vadd.f32 %v926, %v1767
        %v1769 = vpop.f32.mrf.mxu0
        %v1770 = vadd.f32 %v926, %v1769
        %1771 = vmatmul.bf16.gmra.mxu0 %v1439
        %v1772 = vpop.f32.mrf.mxu0
        %v1773 = vadd.f32 %v926, %v1772
        %v1774 = vpop.f32.mrf.mxu0
        %v1775 = vadd.f32 %v926, %v1774
        %1776 = vdwg.mxu0
        %v1777 = vmax.f32 %v1458, 0.0
        %v1778 = vmax.f32 %v1460, 0.0
        %v1779 = vmax.f32 %v1463, 0.0
        %v1780 = vmax.f32 %v1465, 0.0
        %v1781 = vmax.f32 %v1468, 0.0
        %v1782 = vmax.f32 %v1470, 0.0
        %v1783 = vmax.f32 %v1473, 0.0
        %v1784 = vmax.f32 %v1475, 0.0
        %v1785 = vmax.f32 %v1478, 0.0
        %v1786 = vmax.f32 %v1480, 0.0
        %v1787 = vmax.f32 %v1483, 0.0
        %v1788 = vmax.f32 %v1485, 0.0
        %v1789 = vmax.f32 %v1488, 0.0
        %v1790 = vmax.f32 %v1490, 0.0
        %v1791 = vmax.f32 %v1493, 0.0
        %v1792 = vmax.f32 %v1495, 0.0
        %v1793 = vmax.f32 %v1498, 0.0
        %v1794 = vmax.f32 %v1500, 0.0
        %v1795 = vmax.f32 %v1503, 0.0
        %v1796 = vmax.f32 %v1505, 0.0
        %v1797 = vmax.f32 %v1508, 0.0
        %v1798 = vmax.f32 %v1510, 0.0
        %v1799 = vmax.f32 %v1513, 0.0
        %v1800 = vmax.f32 %v1515, 0.0
        %v1801 = vmax.f32 %v1518, 0.0
        %v1802 = vmax.f32 %v1520, 0.0
        %v1803 = vmax.f32 %v1523, 0.0
        %v1804 = vmax.f32 %v1525, 0.0
        %v1805 = vmax.f32 %v1528, 0.0
        %v1806 = vmax.f32 %v1530, 0.0
        %v1807 = vmax.f32 %v1533, 0.0
        %v1808 = vmax.f32 %v1535, 0.0
        %v1809 = vmax.f32 %v1538, 0.0
        %v1810 = vmax.f32 %v1540, 0.0
        %v1811 = vmax.f32 %v1543, 0.0
        %v1812 = vmax.f32 %v1545, 0.0
        %v1813 = vmax.f32 %v1548, 0.0
        %v1814 = vmax.f32 %v1550, 0.0
        %v1815 = vmax.f32 %v1553, 0.0
        %v1816 = vmax.f32 %v1555, 0.0
        %v1817 = vmax.f32 %v1558, 0.0
        %v1818 = vmax.f32 %v1560, 0.0
        %v1819 = vmax.f32 %v1563, 0.0
        %v1820 = vmax.f32 %v1565, 0.0
        %v1821 = vmax.f32 %v1568, 0.0
        %v1822 = vmax.f32 %v1570, 0.0
        %v1823 = vmax.f32 %v1573, 0.0
        %v1824 = vmax.f32 %v1575, 0.0
        %v1825 = vmax.f32 %v1578, 0.0
        %v1826 = vmax.f32 %v1580, 0.0
        %v1827 = vmax.f32 %v1583, 0.0
        %v1828 = vmax.f32 %v1585, 0.0
        %v1829 = vmax.f32 %v1588, 0.0
        %v1830 = vmax.f32 %v1590, 0.0
        %v1831 = vmax.f32 %v1593, 0.0
        %v1832 = vmax.f32 %v1595, 0.0
        %v1833 = vmax.f32 %v1598, 0.0
        %v1834 = vmax.f32 %v1600, 0.0
        %v1835 = vmax.f32 %v1603, 0.0
        %v1836 = vmax.f32 %v1605, 0.0
        %v1837 = vmax.f32 %v1608, 0.0
        %v1838 = vmax.f32 %v1610, 0.0
        %v1839 = vmax.f32 %v1613, 0.0
        %v1840 = vmax.f32 %v1615, 0.0
        %v1841 = vmax.f32 %v1618, 0.0
        %v1842 = vmax.f32 %v1620, 0.0
        %v1843 = vmax.f32 %v1623, 0.0
        %v1844 = vmax.f32 %v1625, 0.0
        %v1845 = vmax.f32 %v1628, 0.0
        %v1846 = vmax.f32 %v1630, 0.0
        %v1847 = vmax.f32 %v1633, 0.0
        %v1848 = vmax.f32 %v1635, 0.0
        %v1849 = vmax.f32 %v1638, 0.0
        %v1850 = vmax.f32 %v1640, 0.0
        %v1851 = vmax.f32 %v1643, 0.0
        %v1852 = vmax.f32 %v1645, 0.0
        %v1853 = vmax.f32 %v1648, 0.0
        %v1854 = vmax.f32 %v1650, 0.0
        %v1855 = vmax.f32 %v1653, 0.0
        %v1856 = vmax.f32 %v1655, 0.0
        %v1857 = vmax.f32 %v1658, 0.0
        %v1858 = vmax.f32 %v1660, 0.0
        %v1859 = vmax.f32 %v1663, 0.0
        %v1860 = vmax.f32 %v1665, 0.0
        %v1861 = vmax.f32 %v1668, 0.0
        %v1862 = vmax.f32 %v1670, 0.0
        %v1863 = vmax.f32 %v1673, 0.0
        %v1864 = vmax.f32 %v1675, 0.0
        %v1865 = vmax.f32 %v1678, 0.0
        %v1866 = vmax.f32 %v1680, 0.0
        %v1867 = vmax.f32 %v1683, 0.0
        %v1868 = vmax.f32 %v1685, 0.0
        %v1869 = vmax.f32 %v1688, 0.0
        %v1870 = vmax.f32 %v1690, 0.0
        %v1871 = vmax.f32 %v1693, 0.0
        %v1872 = vmax.f32 %v1695, 0.0
        %v1873 = vmax.f32 %v1698, 0.0
        %v1874 = vmax.f32 %v1700, 0.0
        %v1875 = vmax.f32 %v1703, 0.0
        %v1876 = vmax.f32 %v1705, 0.0
        %v1877 = vmax.f32 %v1708, 0.0
        %v1878 = vmax.f32 %v1710, 0.0
        %v1879 = vmax.f32 %v1713, 0.0
        %v1880 = vmax.f32 %v1715, 0.0
        %v1881 = vmax.f32 %v1718, 0.0
        %v1882 = vmax.f32 %v1720, 0.0
        %v1883 = vmax.f32 %v1723, 0.0
        %v1884 = vmax.f32 %v1725, 0.0
        %v1885 = vmax.f32 %v1728, 0.0
        %v1886 = vmax.f32 %v1730, 0.0
        %v1887 = vmax.f32 %v1733, 0.0
        %v1888 = vmax.f32 %v1735, 0.0
        %v1889 = vmax.f32 %v1738, 0.0
        %v1890 = vmax.f32 %v1740, 0.0
        %v1891 = vmax.f32 %v1743, 0.0
        %v1892 = vmax.f32 %v1745, 0.0
        %v1893 = vmax.f32 %v1748, 0.0
        %v1894 = vmax.f32 %v1750, 0.0
        %v1895 = vmax.f32 %v1753, 0.0
        %v1896 = vmax.f32 %v1755, 0.0
        %v1897 = vmax.f32 %v1758, 0.0
        %v1898 = vmax.f32 %v1760, 0.0
        %v1899 = vmax.f32 %v1763, 0.0
        %v1900 = vmax.f32 %v1765, 0.0
        %v1901 = vmax.f32 %v1768, 0.0
        %v1902 = vmax.f32 %v1770, 0.0
        %v1903 = vmax.f32 %v1773, 0.0
        %v1904 = vmax.f32 %v1775, 0.0
        %v1905 = vpack.c.bf16 %v1778, %v1777
        %v1906 = vpack.c.bf16 %v1780, %v1779
        %v1907 = vpack.c.bf16 %v1782, %v1781
        %v1908 = vpack.c.bf16 %v1784, %v1783
        %v1909 = vpack.c.bf16 %v1786, %v1785
        %v1910 = vpack.c.bf16 %v1788, %v1787
        %v1911 = vpack.c.bf16 %v1790, %v1789
        %v1912 = vpack.c.bf16 %v1792, %v1791
        %v1913 = vpack.c.bf16 %v1794, %v1793
        %v1914 = vpack.c.bf16 %v1796, %v1795
        %v1915 = vpack.c.bf16 %v1798, %v1797
        %v1916 = vpack.c.bf16 %v1800, %v1799
        %v1917 = vpack.c.bf16 %v1802, %v1801
        %v1918 = vpack.c.bf16 %v1804, %v1803
        %v1919 = vpack.c.bf16 %v1806, %v1805
        %v1920 = vpack.c.bf16 %v1808, %v1807
        %v1921 = vpack.c.bf16 %v1810, %v1809
        %v1922 = vpack.c.bf16 %v1812, %v1811
        %v1923 = vpack.c.bf16 %v1814, %v1813
        %v1924 = vpack.c.bf16 %v1816, %v1815
        %v1925 = vpack.c.bf16 %v1818, %v1817
        %v1926 = vpack.c.bf16 %v1820, %v1819
        %v1927 = vpack.c.bf16 %v1822, %v1821
        %v1928 = vpack.c.bf16 %v1824, %v1823
        %v1929 = vpack.c.bf16 %v1826, %v1825
        %v1930 = vpack.c.bf16 %v1828, %v1827
        %v1931 = vpack.c.bf16 %v1830, %v1829
        %v1932 = vpack.c.bf16 %v1832, %v1831
        %v1933 = vpack.c.bf16 %v1834, %v1833
        %v1934 = vpack.c.bf16 %v1836, %v1835
        %v1935 = vpack.c.bf16 %v1838, %v1837
        %v1936 = vpack.c.bf16 %v1840, %v1839
        %v1937 = vpack.c.bf16 %v1842, %v1841
        %v1938 = vpack.c.bf16 %v1844, %v1843
        %v1939 = vpack.c.bf16 %v1846, %v1845
        %v1940 = vpack.c.bf16 %v1848, %v1847
        %v1941 = vpack.c.bf16 %v1850, %v1849
        %v1942 = vpack.c.bf16 %v1852, %v1851
        %v1943 = vpack.c.bf16 %v1854, %v1853
        %v1944 = vpack.c.bf16 %v1856, %v1855
        %v1945 = vpack.c.bf16 %v1858, %v1857
        %v1946 = vpack.c.bf16 %v1860, %v1859
        %v1947 = vpack.c.bf16 %v1862, %v1861
        %v1948 = vpack.c.bf16 %v1864, %v1863
        %v1949 = vpack.c.bf16 %v1866, %v1865
        %v1950 = vpack.c.bf16 %v1868, %v1867
        %v1951 = vpack.c.bf16 %v1870, %v1869
        %v1952 = vpack.c.bf16 %v1872, %v1871
        %v1953 = vpack.c.bf16 %v1874, %v1873
        %v1954 = vpack.c.bf16 %v1876, %v1875
        %v1955 = vpack.c.bf16 %v1878, %v1877
        %v1956 = vpack.c.bf16 %v1880, %v1879
        %v1957 = vpack.c.bf16 %v1882, %v1881
        %v1958 = vpack.c.bf16 %v1884, %v1883
        %v1959 = vpack.c.bf16 %v1886, %v1885
        %v1960 = vpack.c.bf16 %v1888, %v1887
        %v1961 = vpack.c.bf16 %v1890, %v1889
        %v1962 = vpack.c.bf16 %v1892, %v1891
        %v1963 = vpack.c.bf16 %v1894, %v1893
        %v1964 = vpack.c.bf16 %v1896, %v1895
        %v1965 = vpack.c.bf16 %v1898, %v1897
        %v1966 = vpack.c.bf16 %v1900, %v1899
        %v1967 = vpack.c.bf16 %v1902, %v1901
        %v1968 = vpack.c.bf16 %v1904, %v1903
        %v1969 = vld [vmem:[%s3] sm:$0xf]
        %v1970 = vld [vmem:[%s3 + $0x4] sm:$0xf]
        %v1971 = vld [vmem:[%s3 + $0x8] sm:$0xf]
        %v1972 = vld [vmem:[%s3 + $0xc] sm:$0xf]
        %v1973 = vld [vmem:[%s4] sm:$0xff]
        %v1974 = vld [vmem:[%s4 + $0x8] sm:$0xff]
        %v1975 = vld [vmem:[%s4 + $0x10] sm:$0xff]
        %v1976 = vld [vmem:[%s4 + $0x18] sm:$0xff]
        %1978 = vset.pattern.permute.xlu0 0
        %1979 = vperm.xlu0 %1978, %v1973
        %v1980 = vpop.permute.xlu0 %1979
        %1983 = vset.pattern.permute.xlu0 0
        %1984 = vperm.xlu0 %1983, %v1974
        %v1985 = vpop.permute.xlu0 %1984
        %1988 = vset.pattern.permute.xlu0 0
        %1989 = vperm.xlu0 %1988, %v1975
        %v1990 = vpop.permute.xlu0 %1989
        %1993 = vset.pattern.permute.xlu0 0
        %1994 = vperm.xlu0 %1993, %v1976
        %v1995 = vpop.permute.xlu0 %1994
        %v2001 = vunpack.c.l.b16 %v1969
        %v2002 = vunpack.c.l.b16 %v1970
        %v2003 = vunpack.c.l.b16 %v1971
        %v2004 = vunpack.c.l.b16 %v1972
        %v2005 = vpack.c.b16 %v2002, %v2001
        %v2006 = vpack.c.b16 %v2004, %v2003
        %vm2007 = vcmask 130048
        %v2009 = vsel %vm2007, %v2005, 0
        %v2012 = vsel %vm2007, %v2006, 0
        %v2015 = vsel %vm2007, %v1905, 0
        %v2018 = vsel %vm2007, %v1906, 0
        %v2021 = vsel %vm2007, %v1907, 0
        %v2024 = vsel %vm2007, %v1908, 0
        %v2027 = vsel %vm2007, %v1909, 0
        %v2030 = vsel %vm2007, %v1910, 0
        %v2033 = vsel %vm2007, %v1911, 0
        %v2036 = vsel %vm2007, %v1912, 0
        %v2039 = vsel %vm2007, %v1913, 0
        %v2042 = vsel %vm2007, %v1914, 0
        %v2045 = vsel %vm2007, %v1915, 0
        %v2048 = vsel %vm2007, %v1916, 0
        %v2051 = vsel %vm2007, %v1917, 0
        %v2054 = vsel %vm2007, %v1918, 0
        %v2057 = vsel %vm2007, %v1919, 0
        %v2060 = vsel %vm2007, %v1920, 0
        %v2063 = vsel %vm2007, %v1921, 0
        %v2066 = vsel %vm2007, %v1922, 0
        %v2069 = vsel %vm2007, %v1923, 0
        %v2072 = vsel %vm2007, %v1924, 0
        %v2075 = vsel %vm2007, %v1925, 0
        %v2078 = vsel %vm2007, %v1926, 0
        %v2081 = vsel %vm2007, %v1927, 0
        %v2084 = vsel %vm2007, %v1928, 0
        %v2087 = vsel %vm2007, %v1929, 0
        %v2090 = vsel %vm2007, %v1930, 0
        %v2093 = vsel %vm2007, %v1931, 0
        %v2096 = vsel %vm2007, %v1932, 0
        %v2099 = vsel %vm2007, %v1933, 0
        %v2102 = vsel %vm2007, %v1934, 0
        %v2105 = vsel %vm2007, %v1935, 0
        %v2108 = vsel %vm2007, %v1936, 0
        %v2111 = vsel %vm2007, %v1937, 0
        %v2114 = vsel %vm2007, %v1938, 0
        %v2117 = vsel %vm2007, %v1939, 0
        %v2120 = vsel %vm2007, %v1940, 0
        %v2123 = vsel %vm2007, %v1941, 0
        %v2126 = vsel %vm2007, %v1942, 0
        %v2129 = vsel %vm2007, %v1943, 0
        %v2132 = vsel %vm2007, %v1944, 0
        %v2135 = vsel %vm2007, %v1945, 0
        %v2138 = vsel %vm2007, %v1946, 0
        %v2141 = vsel %vm2007, %v1947, 0
        %v2144 = vsel %vm2007, %v1948, 0
        %v2147 = vsel %vm2007, %v1949, 0
        %v2150 = vsel %vm2007, %v1950, 0
        %v2153 = vsel %vm2007, %v1951, 0
        %v2156 = vsel %vm2007, %v1952, 0
        %v2159 = vsel %vm2007, %v1953, 0
        %v2162 = vsel %vm2007, %v1954, 0
        %v2165 = vsel %vm2007, %v1955, 0
        %v2168 = vsel %vm2007, %v1956, 0
        %v2171 = vsel %vm2007, %v1957, 0
        %v2174 = vsel %vm2007, %v1958, 0
        %v2177 = vsel %vm2007, %v1959, 0
        %v2180 = vsel %vm2007, %v1960, 0
        %v2183 = vsel %vm2007, %v1961, 0
        %v2186 = vsel %vm2007, %v1962, 0
        %v2189 = vsel %vm2007, %v1963, 0
        %v2192 = vsel %vm2007, %v1964, 0
        %v2195 = vsel %vm2007, %v1965, 0
        %v2198 = vsel %vm2007, %v1966, 0
        %v2201 = vsel %vm2007, %v1967, 0
        %v2204 = vsel %vm2007, %v1968, 0
        %2206 = vmatpush.bf16.xpose.msra.mxu0 %v2036
        %2207 = vmatpush.bf16.xpose.msra.mxu0 %v2033
        %2208 = vmatpush.bf16.xpose.msra.mxu0 %v2030
        %2209 = vmatpush.bf16.xpose.msra.mxu0 %v2027
        %2210 = vmatpush.bf16.xpose.msra.mxu0 %v2024
        %2211 = vmatpush.bf16.xpose.msra.mxu0 %v2021
        %2212 = vmatpush.bf16.xpose.msra.mxu0 %v2018
        %2213 = vmatpush.bf16.xpose.msra.mxu0 %v2015
        %2214 = vmatmul.bf16.gmra.mxu0 %v2009
        %v2215 = vpop.f32.mrf.mxu0
        %v2216 = vadd.f32 %v1980, %v2215
        %v2217 = vpop.f32.mrf.mxu0
        %v2218 = vadd.f32 %v1985, %v2217
        %2219 = vmatmul.bf16.gmra.mxu0 %v2012
        %v2220 = vpop.f32.mrf.mxu0
        %v2221 = vadd.f32 %v1990, %v2220
        %v2222 = vpop.f32.mrf.mxu0
        %v2223 = vadd.f32 %v1995, %v2222
        %2224 = vdwg.mxu0
        %2225 = vmatpush.bf16.xpose.msra.mxu0 %v2060
        %2226 = vmatpush.bf16.xpose.msra.mxu0 %v2057
        %2227 = vmatpush.bf16.xpose.msra.mxu0 %v2054
        %2228 = vmatpush.bf16.xpose.msra.mxu0 %v2051
        %2229 = vmatpush.bf16.xpose.msra.mxu0 %v2048
        %2230 = vmatpush.bf16.xpose.msra.mxu0 %v2045
        %2231 = vmatpush.bf16.xpose.msra.mxu0 %v2042
        %2232 = vmatpush.bf16.xpose.msra.mxu0 %v2039
        %2233 = vmatmul.bf16.gmra.mxu0 %v2009
        %v2234 = vpop.f32.mrf.mxu0
        %v2235 = vadd.f32 %v1980, %v2234
        %v2236 = vpop.f32.mrf.mxu0
        %v2237 = vadd.f32 %v1985, %v2236
        %2238 = vmatmul.bf16.gmra.mxu0 %v2012
        %v2239 = vpop.f32.mrf.mxu0
        %v2240 = vadd.f32 %v1990, %v2239
        %v2241 = vpop.f32.mrf.mxu0
        %v2242 = vadd.f32 %v1995, %v2241
        %2243 = vdwg.mxu0
        %2244 = vmatpush.bf16.xpose.msra.mxu0 %v2084
        %2245 = vmatpush.bf16.xpose.msra.mxu0 %v2081
        %2246 = vmatpush.bf16.xpose.msra.mxu0 %v2078
        %2247 = vmatpush.bf16.xpose.msra.mxu0 %v2075
        %2248 = vmatpush.bf16.xpose.msra.mxu0 %v2072
        %2249 = vmatpush.bf16.xpose.msra.mxu0 %v2069
        %2250 = vmatpush.bf16.xpose.msra.mxu0 %v2066
        %2251 = vmatpush.bf16.xpose.msra.mxu0 %v2063
        %2252 = vmatmul.bf16.gmra.mxu0 %v2009
        %v2253 = vpop.f32.mrf.mxu0
        %v2254 = vadd.f32 %v1980, %v2253
        %v2255 = vpop.f32.mrf.mxu0
        %v2256 = vadd.f32 %v1985, %v2255
        %2257 = vmatmul.bf16.gmra.mxu0 %v2012
        %v2258 = vpop.f32.mrf.mxu0
        %v2259 = vadd.f32 %v1990, %v2258
        %v2260 = vpop.f32.mrf.mxu0
        %v2261 = vadd.f32 %v1995, %v2260
        %2262 = vdwg.mxu0
        %2263 = vmatpush.bf16.xpose.msra.mxu0 %v2108
        %2264 = vmatpush.bf16.xpose.msra.mxu0 %v2105
        %2265 = vmatpush.bf16.xpose.msra.mxu0 %v2102
        %2266 = vmatpush.bf16.xpose.msra.mxu0 %v2099
        %2267 = vmatpush.bf16.xpose.msra.mxu0 %v2096
        %2268 = vmatpush.bf16.xpose.msra.mxu0 %v2093
        %2269 = vmatpush.bf16.xpose.msra.mxu0 %v2090
        %2270 = vmatpush.bf16.xpose.msra.mxu0 %v2087
        %2271 = vmatmul.bf16.gmra.mxu0 %v2009
        %v2272 = vpop.f32.mrf.mxu0
        %v2273 = vadd.f32 %v1980, %v2272
        %v2274 = vpop.f32.mrf.mxu0
        %v2275 = vadd.f32 %v1985, %v2274
        %2276 = vmatmul.bf16.gmra.mxu0 %v2012
        %v2277 = vpop.f32.mrf.mxu0
        %v2278 = vadd.f32 %v1990, %v2277
        %v2279 = vpop.f32.mrf.mxu0
        %v2280 = vadd.f32 %v1995, %v2279
        %2281 = vdwg.mxu0
        %2282 = vmatpush.bf16.xpose.msra.mxu0 %v2132
        %2283 = vmatpush.bf16.xpose.msra.mxu0 %v2129
        %2284 = vmatpush.bf16.xpose.msra.mxu0 %v2126
        %2285 = vmatpush.bf16.xpose.msra.mxu0 %v2123
        %2286 = vmatpush.bf16.xpose.msra.mxu0 %v2120
        %2287 = vmatpush.bf16.xpose.msra.mxu0 %v2117
        %2288 = vmatpush.bf16.xpose.msra.mxu0 %v2114
        %2289 = vmatpush.bf16.xpose.msra.mxu0 %v2111
        %2290 = vmatmul.bf16.gmra.mxu0 %v2009
        %v2291 = vpop.f32.mrf.mxu0
        %v2292 = vadd.f32 %v1980, %v2291
        %v2293 = vpop.f32.mrf.mxu0
        %v2294 = vadd.f32 %v1985, %v2293
        %2295 = vmatmul.bf16.gmra.mxu0 %v2012
        %v2296 = vpop.f32.mrf.mxu0
        %v2297 = vadd.f32 %v1990, %v2296
        %v2298 = vpop.f32.mrf.mxu0
        %v2299 = vadd.f32 %v1995, %v2298
        %2300 = vdwg.mxu0
        %2301 = vmatpush.bf16.xpose.msra.mxu0 %v2156
        %2302 = vmatpush.bf16.xpose.msra.mxu0 %v2153
        %2303 = vmatpush.bf16.xpose.msra.mxu0 %v2150
        %2304 = vmatpush.bf16.xpose.msra.mxu0 %v2147
        %2305 = vmatpush.bf16.xpose.msra.mxu0 %v2144
        %2306 = vmatpush.bf16.xpose.msra.mxu0 %v2141
        %2307 = vmatpush.bf16.xpose.msra.mxu0 %v2138
        %2308 = vmatpush.bf16.xpose.msra.mxu0 %v2135
        %2309 = vmatmul.bf16.gmra.mxu0 %v2009
        %v2310 = vpop.f32.mrf.mxu0
        %v2311 = vadd.f32 %v1980, %v2310
        %v2312 = vpop.f32.mrf.mxu0
        %v2313 = vadd.f32 %v1985, %v2312
        %2314 = vmatmul.bf16.gmra.mxu0 %v2012
        %v2315 = vpop.f32.mrf.mxu0
        %v2316 = vadd.f32 %v1990, %v2315
        %v2317 = vpop.f32.mrf.mxu0
        %v2318 = vadd.f32 %v1995, %v2317
        %2319 = vdwg.mxu0
        %2320 = vmatpush.bf16.xpose.msra.mxu0 %v2180
        %2321 = vmatpush.bf16.xpose.msra.mxu0 %v2177
        %2322 = vmatpush.bf16.xpose.msra.mxu0 %v2174
        %2323 = vmatpush.bf16.xpose.msra.mxu0 %v2171
        %2324 = vmatpush.bf16.xpose.msra.mxu0 %v2168
        %2325 = vmatpush.bf16.xpose.msra.mxu0 %v2165
        %2326 = vmatpush.bf16.xpose.msra.mxu0 %v2162
        %2327 = vmatpush.bf16.xpose.msra.mxu0 %v2159
        %2328 = vmatmul.bf16.gmra.mxu0 %v2009
        %v2329 = vpop.f32.mrf.mxu0
        %v2330 = vadd.f32 %v1980, %v2329
        %v2331 = vpop.f32.mrf.mxu0
        %v2332 = vadd.f32 %v1985, %v2331
        %2333 = vmatmul.bf16.gmra.mxu0 %v2012
        %v2334 = vpop.f32.mrf.mxu0
        %v2335 = vadd.f32 %v1990, %v2334
        %v2336 = vpop.f32.mrf.mxu0
        %v2337 = vadd.f32 %v1995, %v2336
        %2338 = vdwg.mxu0
        %2339 = vmatpush.bf16.xpose.msra.mxu0 %v2204
        %2340 = vmatpush.bf16.xpose.msra.mxu0 %v2201
        %2341 = vmatpush.bf16.xpose.msra.mxu0 %v2198
        %2342 = vmatpush.bf16.xpose.msra.mxu0 %v2195
        %2343 = vmatpush.bf16.xpose.msra.mxu0 %v2192
        %2344 = vmatpush.bf16.xpose.msra.mxu0 %v2189
        %2345 = vmatpush.bf16.xpose.msra.mxu0 %v2186
        %2346 = vmatpush.bf16.xpose.msra.mxu0 %v2183
        %2347 = vmatmul.bf16.gmra.mxu0 %v2009
        %v2348 = vpop.f32.mrf.mxu0
        %v2349 = vadd.f32 %v1980, %v2348
        %v2350 = vpop.f32.mrf.mxu0
        %v2351 = vadd.f32 %v1985, %v2350
        %2352 = vmatmul.bf16.gmra.mxu0 %v2012
        %v2353 = vpop.f32.mrf.mxu0
        %v2354 = vadd.f32 %v1990, %v2353
        %v2355 = vpop.f32.mrf.mxu0
        %v2356 = vadd.f32 %v1995, %v2355
        %2357 = vdwg.mxu0
        %v2358 = vmax.f32 %v2216, 0.0
        %v2359 = vmax.f32 %v2235, 0.0
        %v2360 = vmax.f32 %v2254, 0.0
        %v2361 = vmax.f32 %v2273, 0.0
        %v2362 = vmax.f32 %v2292, 0.0
        %v2363 = vmax.f32 %v2311, 0.0
        %v2364 = vmax.f32 %v2330, 0.0
        %v2365 = vmax.f32 %v2349, 0.0
        %v2366 = vmax.f32 %v2218, 0.0
        %v2367 = vmax.f32 %v2237, 0.0
        %v2368 = vmax.f32 %v2256, 0.0
        %v2369 = vmax.f32 %v2275, 0.0
        %v2370 = vmax.f32 %v2294, 0.0
        %v2371 = vmax.f32 %v2313, 0.0
        %v2372 = vmax.f32 %v2332, 0.0
        %v2373 = vmax.f32 %v2351, 0.0
        %v2374 = vmax.f32 %v2221, 0.0
        %v2375 = vmax.f32 %v2240, 0.0
        %v2376 = vmax.f32 %v2259, 0.0
        %v2377 = vmax.f32 %v2278, 0.0
        %v2378 = vmax.f32 %v2297, 0.0
        %v2379 = vmax.f32 %v2316, 0.0
        %v2380 = vmax.f32 %v2335, 0.0
        %v2381 = vmax.f32 %v2354, 0.0
        %v2382 = vmax.f32 %v2223, 0.0
        %v2383 = vmax.f32 %v2242, 0.0
        %v2384 = vmax.f32 %v2261, 0.0
        %v2385 = vmax.f32 %v2280, 0.0
        %v2386 = vmax.f32 %v2299, 0.0
        %v2387 = vmax.f32 %v2318, 0.0
        %v2388 = vmax.f32 %v2337, 0.0
        %v2389 = vmax.f32 %v2356, 0.0
        %v2390 = vmax.f32 %v2358, %v2359
        %v2391 = vmax.f32 %v2366, %v2367
        %v2392 = vmax.f32 %v2374, %v2375
        %v2393 = vmax.f32 %v2382, %v2383
        %v2394 = vmax.f32 %v2390, %v2360
        %v2395 = vmax.f32 %v2391, %v2368
        %v2396 = vmax.f32 %v2392, %v2376
        %v2397 = vmax.f32 %v2393, %v2384
        %v2398 = vmax.f32 %v2394, %v2361
        %v2399 = vmax.f32 %v2395, %v2369
        %v2400 = vmax.f32 %v2396, %v2377
        %v2401 = vmax.f32 %v2397, %v2385
        %v2402 = vmax.f32 %v2398, %v2362
        %v2403 = vmax.f32 %v2399, %v2370
        %v2404 = vmax.f32 %v2400, %v2378
        %v2405 = vmax.f32 %v2401, %v2386
        %v2406 = vmax.f32 %v2402, %v2363
        %v2407 = vmax.f32 %v2403, %v2371
        %v2408 = vmax.f32 %v2404, %v2379
        %v2409 = vmax.f32 %v2405, %v2387
        %v2410 = vmax.f32 %v2406, %v2364
        %v2411 = vmax.f32 %v2407, %v2372
        %v2412 = vmax.f32 %v2408, %v2380
        %v2413 = vmax.f32 %v2409, %v2388
        %v2414 = vmax.f32 %v2410, %v2365
        %v2415 = vmax.f32 %v2411, %v2373
        %v2416 = vmax.f32 %v2412, %v2381
        %v2417 = vmax.f32 %v2413, %v2389
        %2418 = vst [vmem:[%s792] sm:$0xff] %v2414
        %2419 = vst [vmem:[%s792 + $0x8] sm:$0xff] %v2415
        %2420 = vst [vmem:[%s792 + $0x10] sm:$0xff] %v2416
        %2421 = vst [vmem:[%s792 + $0x18] sm:$0xff] %v2417
        %s2422 = sand.u32 %s153, 1
        %s2423 = scalar_lea.sflag [#allocation4], %s2422
        %s2424 = sand.u32 %s153, 1
        %s2425 = smul.addr %s2424, 32
        %s2426 = scalar_lea.vmem [#allocation3], %s2425
        // Predicated region
        $region82: #{tpu_custom_call.1} parent=76 // pred_check
          %p2427 = pneg %p163
        $region83: #{tpu_custom_call.1} parent=76 // pred_check_branch
          %2429 = sbr.rel (%p2427) target = $region85
        $region84: #{tpu_custom_call.1} parent=76 // pred_region
          %2431 = vsyncadd %s2423, 0
          %s2432 = smul.addr %s23, 8
          %s2433 = sadd.s32 %s24, %s2432
          %s2434 = smul.addr %s2433, 8
          %s2435 = scalar_lea.hbm %s5, %s2434
          %s2436 = sshll.u32 %s2426, 4
          %s2437 = int_to_ptr.vmem [resolvable:$true] %s2436
          %s2438 = sshll.u32 %s2435, 4
          %s2439 = int_to_ptr.hbm [resolvable:$true] %s2438
          %2444 = dma.vmem_to_hbm [thread:$0]  %s2437, 512, %s2439, %s2423, 128, 256, 8
        $region85: #{tpu_custom_call.1} parent=76 // pred_fallthru
          _
      $region77: #{tpu_custom_call.1} parent=5 // pred_fallthru
        _
      %p2445 = scmp.le.s32.totalorder 2, %s14
      // Predicated region
      $region86: #{tpu_custom_call.1} parent=5 // pred_check
        %p2446 = pneg %p2445
      $region87: #{tpu_custom_call.1} parent=5 // pred_check_branch
        %2448 = sbr.rel (%p2446) target = $region89
      $region88: #{tpu_custom_call.1} parent=5 // pred_region
        %s2449 = ssub.s32 %s14, 2
        // Predicated region
        $region90: #{tpu_custom_call.1} parent=88 // pred_check
          %p2450 = pneg %p169
        $region91: #{tpu_custom_call.1} parent=88 // pred_check_branch
          %2452 = sbr.rel (%p2450) target = $region93
        $region92: #{tpu_custom_call.1} parent=88 // pred_region
          %s2453 = sand.u32 %s154, 1
          %s2454 = scalar_lea.sflag [#allocation4], %s2453
          %s2455 = sand.u32 %s154, 1
          %s2456 = smul.addr %s2455, 32
          %s2457 = scalar_lea.vmem [#allocation3], %s2456
          %2459 = dma.done %s2454, 512
        $region93: #{tpu_custom_call.1} parent=88 // pred_fallthru
          _
      $region89: #{tpu_custom_call.1} parent=5 // pred_fallthru
        _
    $region6: #{tpu_custom_call.1} parent=1 // loop_footer
      %s18 = sadd.s32 1, %s14
    $region7: #{tpu_custom_call.1} parent=1 // loop_footer_branch
      %13 = sbr.rel target = $region3
    $region8: #{tpu_custom_call.1} parent=1 // loop_exit
      _
    %2460 = vsyncpa [#allocation4], 1
    %s2461 = scalar_lea.sflag [#allocation4], 1
    %2462 = vsyncpa %s2461, 1

</llo_original>
